<compile_context>
chip_gen: v6e
topology: v6e:2x2x1
jax: 0.10.0
libtpu: 0.0.40
codegen_flags: <defaults>
</compile_context>

<pallas_src>
import functools
import math

import jax
import jax.numpy as jnp
from jax.experimental import pallas as pl
from jax.experimental.pallas import tpu as pltpu


def _gelu(x, approximate):
    if approximate:
        # tanh-approximate GELU -> EUP (frees VALU slots on v6e/v7x).
        return jax.nn.gelu(x, approximate=True)
    # Exact erf-based GELU, matching torch.nn.GELU() default numerics.
    return 0.5 * x * (1.0 + jax.lax.erf(x * (1.0 / math.sqrt(2.0))))


def _round_up(x, m):
    return ((x + m - 1) // m) * m


def _vmem_limit_bytes():
    """Generation-gated scoped-VMEM limit.

    v7x has 64 MiB physical VMEM per TensorCore (cap well below it to leave
    headroom for compiler-internal scratch); v5e/v6e have 128 MiB.
    """
    try:
        phys = int(pltpu.get_tpu_info().vmem_capacity_bytes)
    except Exception:
        phys = 64 * 1024 * 1024  # conservative: assume the smallest (v7x per-TC)
    if phys <= 64 * 1024 * 1024:
        return 52 * 1024 * 1024
    return 100 * 1024 * 1024


def _resident_fits(E, M, row_tile, out_itemsize, vmem_limit):
    """Rough VMEM working-set estimate for the resident-weight path."""
    w_bytes = 2 * E * M * 2                 # w1 + w2, bf16, single-buffered
    per_row = (E * 2 * 2                    # x tile (bf16), double-buffered
               + E * out_itemsize * 2       # out tile, double-buffered
               + M * 4 + M * 2              # h (f32) + bf16 cast for 2nd matmul
               + E * 4 * 3)                 # xn / y f32 temporaries + slack
    params = (M + 4 * E) * 4
    return w_bytes + row_tile * per_row + params <= int(0.75 * vmem_limit)


# --------------------------------------------------------------------------
# Resident-weight kernel: 1-D grid over row tiles; w1/w2 live in VMEM for the
# whole grid.  No scratch: LN is computed inline and the output is written
# directly from the second matmul (+ bias).
# --------------------------------------------------------------------------
def _mlp_resident_kernel(x_ref, g_ref, bt_ref, w1_ref, b1_ref, w2_ref, b2_ref,
                         o_ref, *, eps, approximate_gelu):
    x = x_ref[...].astype(jnp.float32)
    mean = jnp.mean(x, axis=-1, keepdims=True)
    var = jnp.mean((x - mean) * (x - mean), axis=-1, keepdims=True)
    xn = (x - mean) * jax.lax.rsqrt(var + eps)
    xn = xn * g_ref[...].astype(jnp.float32) + bt_ref[...].astype(jnp.float32)

    # Linear1 (E -> M), bias, GELU.  bf16 MXU operands, f32 accumulation/math.
    h = jnp.dot(xn.astype(jnp.bfloat16), w1_ref[...],
                preferred_element_type=jnp.float32)
    h = _gelu(h + b1_ref[...].astype(jnp.float32), approximate_gelu)
    # TODO(synk): dropout omitted (identity in eval mode).

    # Linear2 (M -> E), bias, lane-dense store.
    y = jnp.dot(h.astype(jnp.bfloat16), w2_ref[...],
                preferred_element_type=jnp.float32)
    y = y + b2_ref[...].astype(jnp.float32)
    # TODO(synk): second dropout omitted (identity in eval mode).
    o_ref[...] = y.astype(o_ref.dtype)


# --------------------------------------------------------------------------
# Chunked-hidden-dim fallback kernel: grid axis 1 walks M chunks; LN(x) is
# cached in bf16 scratch, output accumulates in f32 scratch.
# --------------------------------------------------------------------------
def _mlp_chunked_kernel(x_ref, g_ref, bt_ref, w1_ref, b1_ref, w2_ref, b2_ref,
                        o_ref, xn_ref, acc_ref, *, eps, approximate_gelu):
    k = pl.program_id(1)

    @pl.when(k == 0)
    def _init():
        x = x_ref[...].astype(jnp.float32)
        mean = jnp.mean(x, axis=-1, keepdims=True)
        var = jnp.mean((x - mean) * (x - mean), axis=-1, keepdims=True)
        xn = (x - mean) * jax.lax.rsqrt(var + eps)
        xn = xn * g_ref[...].astype(jnp.float32) + bt_ref[...].astype(jnp.float32)
        xn_ref[...] = xn.astype(jnp.bfloat16)
        acc_ref[...] = jnp.zeros_like(acc_ref)

    h = jnp.dot(xn_ref[...], w1_ref[...], preferred_element_type=jnp.float32)
    h = _gelu(h + b1_ref[...].astype(jnp.float32), approximate_gelu)
    # TODO(synk): dropout omitted (identity in eval mode).

    acc_ref[...] += jnp.dot(h.astype(jnp.bfloat16), w2_ref[...],
                            preferred_element_type=jnp.float32)

    @pl.when(k == pl.num_programs(1) - 1)
    def _finalize():
        y = acc_ref[...] + b2_ref[...].astype(jnp.float32)
        # TODO(synk): second dropout omitted (identity in eval mode).
        o_ref[...] = y.astype(o_ref.dtype)


def mlp_block(x, gamma, beta, w1, b1, w2, b2, *, eps=1e-5, row_tile=256,
              m_tile=2048, approximate_gelu=False, force_chunked=False):
    """x: (B, S, E). Returns (B, S, E) = Linear2(GELU(Linear1(LN(x))))."""
    B, S, E = x.shape
    M = w1.shape[1]
    R = B * S
    out_dtype = x.dtype
    out_itemsize = jnp.dtype(out_dtype).itemsize

    vmem_limit = _vmem_limit_bytes()
    use_resident = (not force_chunked) and _resident_fits(
        E, M, row_tile, out_itemsize, vmem_limit)
    # When weights must be chunked, raise the row tile toward the roofline
    # crossover so the re-streamed weight DMA hides behind the MXU.
    eff_row_tile = row_tile if use_resident else max(row_tile, 512)

    # bf16 weights: MXU peak throughput and half the weight bytes.
    w1b = w1.astype(jnp.bfloat16)
    w2b = w2.astype(jnp.bfloat16)

    gamma2 = gamma.reshape(1, E).astype(jnp.float32)
    beta2 = beta.reshape(1, E).astype(jnp.float32)
    b2_2 = b2.reshape(1, E).astype(jnp.float32)

    # Stream activations in bf16 (LN stats are computed in f32 in-kernel).
    # Padded rows are zeros and are sliced off at the end.
    R_pad = _round_up(max(R, 1), eff_row_tile)
    x2 = x.reshape(R, E).astype(jnp.bfloat16)
    if R_pad != R:
        x2 = jnp.pad(x2, ((0, R_pad - R), (0, 0)))
    n_row_tiles = R_pad // eff_row_tile

    if use_resident:
        b1_2 = b1.reshape(1, M).astype(jnp.float32)
        cost = pl.CostEstimate(
            flops=int(4 * R * E * M),
            transcendentals=int(R * M),
            bytes_accessed=int(R * E * 2 + R * E * out_itemsize
                               + 2 * E * M * 2 + (M + 3 * E) * 4),
        )
        kernel = functools.partial(_mlp_resident_kernel, eps=eps,
                                   approximate_gelu=approximate_gelu)

        def build(single_buffer_weights):
            if single_buffer_weights:
                # Constant block index => Buffered(1): weights DMA'd once and
                # kept single-buffered (halves resident-weight VMEM on v7x).
                w1_spec = pl.BlockSpec((E, M), lambda i: (0, 0),
                                       pipeline_mode=pl.Buffered(1))
                w2_spec = pl.BlockSpec((M, E), lambda i: (0, 0),
                                       pipeline_mode=pl.Buffered(1))
            else:
                w1_spec = pl.BlockSpec((E, M), lambda i: (0, 0))
                w2_spec = pl.BlockSpec((M, E), lambda i: (0, 0))
            return pl.pallas_call(
                kernel,
                out_shape=jax.ShapeDtypeStruct((R_pad, E), out_dtype),
                grid_spec=pltpu.PrefetchScalarGridSpec(
                    num_scalar_prefetch=0,
                    grid=(n_row_tiles,),
                    in_specs=[
                        pl.BlockSpec((eff_row_tile, E), lambda i: (i, 0)),  # x
                        pl.BlockSpec((1, E), lambda i: (0, 0)),             # gamma
                        pl.BlockSpec((1, E), lambda i: (0, 0)),             # beta
                        w1_spec,                                            # w1
                        pl.BlockSpec((1, M), lambda i: (0, 0)),             # b1
                        w2_spec,                                            # w2
                        pl.BlockSpec((1, E), lambda i: (0, 0)),             # b2
                    ],
                    out_specs=pl.BlockSpec((eff_row_tile, E), lambda i: (i, 0)),
                ),
                compiler_params=pltpu.CompilerParams(
                    dimension_semantics=("parallel",),
                    vmem_limit_bytes=vmem_limit,
                ),
                cost_estimate=cost,
            )

        try:
            out = build(True)(x2, gamma2, beta2, w1b, b1_2, w2b, b2_2)
        except Exception:
            # pipeline_mode=pl.Buffered(1) not supported by this jax build ->
            # fall back to default buffering (weights are still fetched only
            # once thanks to the constant index_map).
            out = build(False)(x2, gamma2, beta2, w1b, b1_2, w2b, b2_2)
    else:
        # Chunk (and zero-pad) the hidden dim so only (E, tk_m)/(tk_m, E)
        # weight slices are resident at a time; padded hidden units contribute
        # exactly zero to the output.
        if M <= m_tile:
            tk_m, M_pad = M, M
        else:
            tk_m = m_tile
            M_pad = _round_up(M, tk_m)
        w1p, b1p, w2p = w1b, b1, w2b
        if M_pad != M:
            w1p = jnp.pad(w1b, ((0, 0), (0, M_pad - M)))
            b1p = jnp.pad(b1, ((0, M_pad - M),))
            w2p = jnp.pad(w2b, ((0, M_pad - M), (0, 0)))
        b1_2 = b1p.reshape(1, M_pad).astype(jnp.float32)
        n_m = M_pad // tk_m

        cost = pl.CostEstimate(
            flops=int(4 * R * E * M),
            transcendentals=int(R * M),
            bytes_accessed=int(R * E * 2 + R * E * out_itemsize
                               + n_row_tiles * 2 * E * M_pad * 2   # re-streamed
                               + (M_pad + 3 * E) * 4),
        )
        kernel = functools.partial(_mlp_chunked_kernel, eps=eps,
                                   approximate_gelu=approximate_gelu)
        out = pl.pallas_call(
            kernel,
            out_shape=jax.ShapeDtypeStruct((R_pad, E), out_dtype),
            grid_spec=pltpu.PrefetchScalarGridSpec(
                num_scalar_prefetch=0,
                grid=(n_row_tiles, n_m),
                in_specs=[
                    pl.BlockSpec((eff_row_tile, E), lambda i, k: (i, 0)),  # x
                    pl.BlockSpec((1, E), lambda i, k: (0, 0)),             # gamma
                    pl.BlockSpec((1, E), lambda i, k: (0, 0)),             # beta
                    pl.BlockSpec((E, tk_m), lambda i, k: (0, k)),          # w1 chunk
                    pl.BlockSpec((1, tk_m), lambda i, k: (0, k)),          # b1 chunk
                    pl.BlockSpec((tk_m, E), lambda i, k: (k, 0)),          # w2 chunk
                    pl.BlockSpec((1, E), lambda i, k: (0, 0)),             # b2
                ],
                out_specs=pl.BlockSpec((eff_row_tile, E), lambda i, k: (i, 0)),
                scratch_shapes=[
                    pltpu.VMEM((eff_row_tile, E), jnp.bfloat16),  # cached LN(x)
                    pltpu.VMEM((eff_row_tile, E), jnp.float32),   # output acc
                ],
            ),
            compiler_params=pltpu.CompilerParams(
                dimension_semantics=("parallel", "arbitrary"),
                vmem_limit_bytes=vmem_limit,
            ),
            cost_estimate=cost,
        )(x2, gamma2, beta2, w1p, b1_2, w2p, b2_2)

    return out[:R].reshape(B, S, E)


def _reference(x, gamma, beta, w1, b1, w2, b2, eps=1e-5):
    mean = jnp.mean(x, axis=-1, keepdims=True)
    var = jnp.mean((x - mean) ** 2, axis=-1, keepdims=True)
    xn = (x - mean) / jnp.sqrt(var + eps) * gamma + beta
    h = _gelu(xn @ w1 + b1, approximate=False)
    return h @ w2 + b2


if __name__ == "__main__":
    # Small shapes consistent with the module: batch=2, seq=8, embed=32, mlp=64.
    B, S, E, M = 2, 8, 32, 64

    key = jax.random.PRNGKey(0)
    kx, kw1, kb1, kw2, kb2 = jax.random.split(key, 5)

    x = jax.random.normal(kx, (B, S, E), dtype=jnp.float32)
    gamma = jnp.ones((E,), jnp.float32)        # nn.LayerNorm init
    beta = jnp.zeros((E,), jnp.float32)
    w1 = jax.random.normal(kw1, (E, M), jnp.float32) * (1.0 / math.sqrt(E))
    b1 = jax.random.normal(kb1, (M,), jnp.float32) * 0.01
    w2 = jax.random.normal(kw2, (M, E), jnp.float32) * (1.0 / math.sqrt(M))
    b2 = jax.random.normal(kb2, (E,), jnp.float32) * 0.01

    # Reference on the same bf16-rounded streamed operands (the kernel streams
    # x and the weights in bf16 with f32 accumulation; the tolerance covers the
    # additional bf16 rounding of the LN/GELU activations before each matmul).
    x_r = x.astype(jnp.bfloat16).astype(jnp.float32)
    w1_r = w1.astype(jnp.bfloat16).astype(jnp.float32)
    w2_r = w2.astype(jnp.bfloat16).astype(jnp.float32)
    y_ref = _reference(x_r, gamma, beta, w1_r, b1, w2_r, b2)

    # Primary (resident-weight) path.
    y = jax.block_until_ready(mlp_block(x, gamma, beta, w1, b1, w2, b2))
    assert y.shape == (B, S, E)
    err = float(jnp.max(jnp.abs(y - y_ref)))
    assert jnp.allclose(y, y_ref, atol=5e-2, rtol=5e-2), (
        f"resident path mismatch vs reference: max abs err = {err}")

    # Chunked fallback path (smoke test; identical semantics).
    y_c = jax.block_until_ready(
        mlp_block(x, gamma, beta, w1, b1, w2, b2, force_chunked=True))
    err_c = float(jnp.max(jnp.abs(y_c - y_ref)))
    assert jnp.allclose(y_c, y_ref, atol=5e-2, rtol=5e-2), (
        f"chunked path mismatch vs reference: max abs err = {err_c}")

    print("KERNEL_OK")
</pallas_src>

<mosaic_0001>
module attributes {stable_mosaic.version = 11 : i64} {
  func.func @_mlp_resident_kernel(%arg0: i32, %arg1: memref<256x32xbf16, #tpu.memory_space<vmem>>, %arg2: memref<1x32xf32, #tpu.memory_space<vmem>>, %arg3: memref<1x32xf32, #tpu.memory_space<vmem>>, %arg4: memref<32x64xbf16, #tpu.memory_space<vmem>>, %arg5: memref<1x64xf32, #tpu.memory_space<vmem>>, %arg6: memref<64x32xbf16, #tpu.memory_space<vmem>>, %arg7: memref<1x32xf32, #tpu.memory_space<vmem>>, %arg8: memref<256x32xf32, #tpu.memory_space<vmem>>) attributes {dimension_semantics = [#tpu.dimension_semantics<parallel>], iteration_bounds = array<i64: 1>, scalar_prefetch = 0 : i64, scratch_operands = 0 : i64, tpu.core_type = #tpu.core_type<tc>, window_params = [{transform_indices = @transform_0, window_bounds = array<i64: 256, 32>}, {pipeline_mode = #tpu.pipeline_mode<synchronous>, transform_indices = @transform_1, window_bounds = array<i64: 1, 32>}, {pipeline_mode = #tpu.pipeline_mode<synchronous>, transform_indices = @transform_2, window_bounds = array<i64: 1, 32>}, {pipeline_mode = #tpu.pipeline_mode<synchronous>, transform_indices = @transform_3, window_bounds = array<i64: 32, 64>}, {pipeline_mode = #tpu.pipeline_mode<synchronous>, transform_indices = @transform_4, window_bounds = array<i64: 1, 64>}, {pipeline_mode = #tpu.pipeline_mode<synchronous>, transform_indices = @transform_5, window_bounds = array<i64: 64, 32>}, {pipeline_mode = #tpu.pipeline_mode<synchronous>, transform_indices = @transform_6, window_bounds = array<i64: 1, 32>}, {transform_indices = @transform_7, window_bounds = array<i64: 256, 32>}]} {
    %c0 = arith.constant 0 : index
    %c0_0 = arith.constant 0 : index
    %0 = vector.load %arg1[%c0, %c0_0] : memref<256x32xbf16, #tpu.memory_space<vmem>>, vector<256x32xbf16>
    %1 = arith.extf %0 : vector<256x32xbf16> to vector<256x32xf32>
    %cst = arith.constant dense<0.000000e+00> : vector<256xf32>
    %2 = vector.multi_reduction <add>, %1, %cst [1] : vector<256x32xf32> to vector<256xf32>
    %3 = vector.shape_cast %2 : vector<256xf32> to vector<256x1xf32>
    %cst_1 = arith.constant 3.200000e+01 : f32
    %4 = vector.broadcast %cst_1 : f32 to vector<256x1xf32>
    %5 = arith.divf %3, %4 : vector<256x1xf32>
    %6 = vector.broadcast %5 : vector<256x1xf32> to vector<256x32xf32>
    %7 = arith.subf %1, %6 : vector<256x32xf32>
    %8 = vector.broadcast %5 : vector<256x1xf32> to vector<256x32xf32>
    %9 = arith.subf %1, %8 : vector<256x32xf32>
    %10 = arith.mulf %7, %9 : vector<256x32xf32>
    %cst_2 = arith.constant dense<0.000000e+00> : vector<256xf32>
    %11 = vector.multi_reduction <add>, %10, %cst_2 [1] : vector<256x32xf32> to vector<256xf32>
    %12 = vector.shape_cast %11 : vector<256xf32> to vector<256x1xf32>
    %cst_3 = arith.constant 3.200000e+01 : f32
    %13 = vector.broadcast %cst_3 : f32 to vector<256x1xf32>
    %14 = arith.divf %12, %13 : vector<256x1xf32>
    %15 = vector.broadcast %5 : vector<256x1xf32> to vector<256x32xf32>
    %16 = arith.subf %1, %15 : vector<256x32xf32>
    %cst_4 = arith.constant 9.99999974E-6 : f32
    %17 = vector.broadcast %cst_4 : f32 to vector<256x1xf32>
    %18 = arith.addf %14, %17 : vector<256x1xf32>
    %19 = math.rsqrt %18 : vector<256x1xf32>
    %20 = vector.broadcast %19 : vector<256x1xf32> to vector<256x32xf32>
    %21 = arith.mulf %16, %20 : vector<256x32xf32>
    %c0_5 = arith.constant 0 : index
    %c0_6 = arith.constant 0 : index
    %22 = vector.load %arg2[%c0_5, %c0_6] : memref<1x32xf32, #tpu.memory_space<vmem>>, vector<1x32xf32>
    %23 = vector.broadcast %22 : vector<1x32xf32> to vector<256x32xf32>
    %24 = arith.mulf %21, %23 : vector<256x32xf32>
    %c0_7 = arith.constant 0 : index
    %c0_8 = arith.constant 0 : index
    %25 = vector.load %arg3[%c0_7, %c0_8] : memref<1x32xf32, #tpu.memory_space<vmem>>, vector<1x32xf32>
    %26 = vector.broadcast %25 : vector<1x32xf32> to vector<256x32xf32>
    %27 = arith.addf %24, %26 : vector<256x32xf32>
    %28 = arith.truncf %27 : vector<256x32xf32> to vector<256x32xbf16>
    %c0_9 = arith.constant 0 : index
    %c0_10 = arith.constant 0 : index
    %29 = vector.load %arg4[%c0_9, %c0_10] : memref<32x64xbf16, #tpu.memory_space<vmem>>, vector<32x64xbf16>
    %cst_11 = arith.constant dense<0.000000e+00> : vector<256x64xf32>
    %30 = tpu.matmul %28, %29, %cst_11 {dimension_numbers = #tpu.dot_dimension_numbers<[1], [0], [0], [1], [0, 0, 1, 1], [], []>} : vector<256x32xbf16>, vector<32x64xbf16>, vector<256x64xf32> -> vector<256x64xf32>
    %c0_12 = arith.constant 0 : index
    %c0_13 = arith.constant 0 : index
    %31 = vector.load %arg5[%c0_12, %c0_13] : memref<1x64xf32, #tpu.memory_space<vmem>>, vector<1x64xf32>
    %32 = vector.broadcast %31 : vector<1x64xf32> to vector<256x64xf32>
    %33 = arith.addf %30, %32 : vector<256x64xf32>
    %cst_14 = arith.constant 5.000000e-01 : f32
    %34 = vector.broadcast %cst_14 : f32 to vector<256x64xf32>
    %35 = arith.mulf %34, %33 : vector<256x64xf32>
    %cst_15 = arith.constant 0.707106769 : f32
    %36 = vector.broadcast %cst_15 : f32 to vector<256x64xf32>
    %37 = arith.mulf %33, %36 : vector<256x64xf32>
    %38 = math.erf %37 : vector<256x64xf32>
    %cst_16 = arith.constant 1.000000e+00 : f32
    %39 = vector.broadcast %cst_16 : f32 to vector<256x64xf32>
    %40 = arith.addf %39, %38 : vector<256x64xf32>
    %41 = arith.mulf %35, %40 : vector<256x64xf32>
    %42 = arith.truncf %41 : vector<256x64xf32> to vector<256x64xbf16>
    %c0_17 = arith.constant 0 : index
    %c0_18 = arith.constant 0 : index
    %43 = vector.load %arg6[%c0_17, %c0_18] : memref<64x32xbf16, #tpu.memory_space<vmem>>, vector<64x32xbf16>
    %cst_19 = arith.constant dense<0.000000e+00> : vector<256x32xf32>
    %44 = tpu.matmul %42, %43, %cst_19 {dimension_numbers = #tpu.dot_dimension_numbers<[1], [0], [0], [1], [0, 0, 1, 1], [], []>} : vector<256x64xbf16>, vector<64x32xbf16>, vector<256x32xf32> -> vector<256x32xf32>
    %c0_20 = arith.constant 0 : index
    %c0_21 = arith.constant 0 : index
    %45 = vector.load %arg7[%c0_20, %c0_21] : memref<1x32xf32, #tpu.memory_space<vmem>>, vector<1x32xf32>
    %46 = vector.broadcast %45 : vector<1x32xf32> to vector<256x32xf32>
    %47 = arith.addf %44, %46 : vector<256x32xf32>
    %c0_22 = arith.constant 0 : index
    %c0_23 = arith.constant 0 : index
    %48 = vector.load %arg8[%c0_22, %c0_23] : memref<256x32xf32, #tpu.memory_space<vmem>>, vector<256x32xf32>
    tpu.vector_store %arg8[%c0_22, %c0_23], %47 {strides = array<i32>} : memref<256x32xf32, #tpu.memory_space<vmem>>, vector<256x32xf32>,
    return
  }
  func.func @transform_0(%arg0: i32) -> (i32, i32) {
    %c0_i32 = arith.constant 0 : i32
    %c0_i32_0 = arith.constant 0 : i32
    return %arg0, %c0_i32 : i32, i32
  }
  func.func @transform_1(%arg0: i32) -> (i32, i32) {
    %c0_i32 = arith.constant 0 : i32
    %c0_i32_0 = arith.constant 0 : i32
    %c0_i32_1 = arith.constant 0 : i32
    return %c0_i32, %c0_i32_0 : i32, i32
  }
  func.func @transform_2(%arg0: i32) -> (i32, i32) {
    %c0_i32 = arith.constant 0 : i32
    %c0_i32_0 = arith.constant 0 : i32
    %c0_i32_1 = arith.constant 0 : i32
    return %c0_i32, %c0_i32_0 : i32, i32
  }
  func.func @transform_3(%arg0: i32) -> (i32, i32) {
    %c0_i32 = arith.constant 0 : i32
    %c0_i32_0 = arith.constant 0 : i32
    %c0_i32_1 = arith.constant 0 : i32
    return %c0_i32, %c0_i32_0 : i32, i32
  }
  func.func @transform_4(%arg0: i32) -> (i32, i32) {
    %c0_i32 = arith.constant 0 : i32
    %c0_i32_0 = arith.constant 0 : i32
    %c0_i32_1 = arith.constant 0 : i32
    return %c0_i32, %c0_i32_0 : i32, i32
  }
  func.func @transform_5(%arg0: i32) -> (i32, i32) {
    %c0_i32 = arith.constant 0 : i32
    %c0_i32_0 = arith.constant 0 : i32
    %c0_i32_1 = arith.constant 0 : i32
    return %c0_i32, %c0_i32_0 : i32, i32
  }
  func.func @transform_6(%arg0: i32) -> (i32, i32) {
    %c0_i32 = arith.constant 0 : i32
    %c0_i32_0 = arith.constant 0 : i32
    %c0_i32_1 = arith.constant 0 : i32
    return %c0_i32, %c0_i32_0 : i32, i32
  }
  func.func @transform_7(%arg0: i32) -> (i32, i32) {
    %c0_i32 = arith.constant 0 : i32
    %c0_i32_0 = arith.constant 0 : i32
    return %arg0, %c0_i32 : i32, i32
  }
}

module attributes {stable_mosaic.version = 11 : i64} {
  func.func @_mlp_resident_kernel(%arg0: i32, %arg1: memref<256x32xbf16, #tpu.memory_space<vmem>>, %arg2: memref<1x32xf32, #tpu.memory_space<vmem>>, %arg3: memref<1x32xf32, #tpu.memory_space<vmem>>, %arg4: memref<32x64xbf16, #tpu.memory_space<vmem>>, %arg5: memref<1x64xf32, #tpu.memory_space<vmem>>, %arg6: memref<64x32xbf16, #tpu.memory_space<vmem>>, %arg7: memref<1x32xf32, #tpu.memory_space<vmem>>, %arg8: memref<256x32xf32, #tpu.memory_space<vmem>>) attributes {dimension_semantics = [#tpu.dimension_semantics<parallel>], iteration_bounds = array<i64: 1>, scalar_prefetch = 0 : i64, scratch_operands = 0 : i64, tpu.core_type = #tpu.core_type<tc>, window_params = [{transform_indices = @transform_0, window_bounds = array<i64: 256, 32>}, {pipeline_mode = #tpu.pipeline_mode<synchronous>, transform_indices = @transform_1, window_bounds = array<i64: 1, 32>}, {pipeline_mode = #tpu.pipeline_mode<synchronous>, transform_indices = @transform_2, window_bounds = array<i64: 1, 32>}, {pipeline_mode = #tpu.pipeline_mode<synchronous>, transform_indices = @transform_3, window_bounds = array<i64: 32, 64>}, {pipeline_mode = #tpu.pipeline_mode<synchronous>, transform_indices = @transform_4, window_bounds = array<i64: 1, 64>}, {pipeline_mode = #tpu.pipeline_mode<synchronous>, transform_indices = @transform_5, window_bounds = array<i64: 64, 32>}, {pipeline_mode = #tpu.pipeline_mode<synchronous>, transform_indices = @transform_6, window_bounds = array<i64: 1, 32>}, {transform_indices = @transform_7, window_bounds = array<i64: 256, 32>}]} {
    %c0 = arith.constant 0 : index
    %c0_0 = arith.constant 0 : index
    %0 = vector.load %arg1[%c0, %c0_0] : memref<256x32xbf16, #tpu.memory_space<vmem>>, vector<256x32xbf16>
    %1 = arith.extf %0 : vector<256x32xbf16> to vector<256x32xf32>
    %cst = arith.constant dense<0.000000e+00> : vector<256xf32>
    %2 = vector.multi_reduction <add>, %1, %cst [1] : vector<256x32xf32> to vector<256xf32>
    %3 = vector.shape_cast %2 : vector<256xf32> to vector<256x1xf32>
    %cst_1 = arith.constant 3.200000e+01 : f32
    %4 = vector.broadcast %cst_1 : f32 to vector<256x1xf32>
    %5 = arith.divf %3, %4 : vector<256x1xf32>
    %6 = vector.broadcast %5 : vector<256x1xf32> to vector<256x32xf32>
    %7 = arith.subf %1, %6 : vector<256x32xf32>
    %8 = vector.broadcast %5 : vector<256x1xf32> to vector<256x32xf32>
    %9 = arith.subf %1, %8 : vector<256x32xf32>
    %10 = arith.mulf %7, %9 : vector<256x32xf32>
    %cst_2 = arith.constant dense<0.000000e+00> : vector<256xf32>
    %11 = vector.multi_reduction <add>, %10, %cst_2 [1] : vector<256x32xf32> to vector<256xf32>
    %12 = vector.shape_cast %11 : vector<256xf32> to vector<256x1xf32>
    %cst_3 = arith.constant 3.200000e+01 : f32
    %13 = vector.broadcast %cst_3 : f32 to vector<256x1xf32>
    %14 = arith.divf %12, %13 : vector<256x1xf32>
    %15 = vector.broadcast %5 : vector<256x1xf32> to vector<256x32xf32>
    %16 = arith.subf %1, %15 : vector<256x32xf32>
    %cst_4 = arith.constant 9.99999974E-6 : f32
    %17 = vector.broadcast %cst_4 : f32 to vector<256x1xf32>
    %18 = arith.addf %14, %17 : vector<256x1xf32>
    %19 = math.rsqrt %18 : vector<256x1xf32>
    %20 = vector.broadcast %19 : vector<256x1xf32> to vector<256x32xf32>
    %21 = arith.mulf %16, %20 : vector<256x32xf32>
    %c0_5 = arith.constant 0 : index
    %c0_6 = arith.constant 0 : index
    %22 = vector.load %arg2[%c0_5, %c0_6] : memref<1x32xf32, #tpu.memory_space<vmem>>, vector<1x32xf32>
    %23 = vector.broadcast %22 : vector<1x32xf32> to vector<256x32xf32>
    %24 = arith.mulf %21, %23 : vector<256x32xf32>
    %c0_7 = arith.constant 0 : index
    %c0_8 = arith.constant 0 : index
    %25 = vector.load %arg3[%c0_7, %c0_8] : memref<1x32xf32, #tpu.memory_space<vmem>>, vector<1x32xf32>
    %26 = vector.broadcast %25 : vector<1x32xf32> to vector<256x32xf32>
    %27 = arith.addf %24, %26 : vector<256x32xf32>
    %28 = arith.truncf %27 : vector<256x32xf32> to vector<256x32xbf16>
    %c0_9 = arith.constant 0 : index
    %c0_10 = arith.constant 0 : index
    %29 = vector.load %arg4[%c0_9, %c0_10] : memref<32x64xbf16, #tpu.memory_space<vmem>>, vector<32x64xbf16>
    %cst_11 = arith.constant dense<0.000000e+00> : vector<256x64xf32>
    %30 = tpu.matmul %28, %29, %cst_11 {dimension_numbers = #tpu.dot_dimension_numbers<[1], [0], [0], [1], [0, 0, 1, 1], [], []>} : vector<256x32xbf16>, vector<32x64xbf16>, vector<256x64xf32> -> vector<256x64xf32>
    %c0_12 = arith.constant 0 : index
    %c0_13 = arith.constant 0 : index
    %31 = vector.load %arg5[%c0_12, %c0_13] : memref<1x64xf32, #tpu.memory_space<vmem>>, vector<1x64xf32>
    %32 = vector.broadcast %31 : vector<1x64xf32> to vector<256x64xf32>
    %33 = arith.addf %30, %32 : vector<256x64xf32>
    %cst_14 = arith.constant 5.000000e-01 : f32
    %34 = vector.broadcast %cst_14 : f32 to vector<256x64xf32>
    %35 = arith.mulf %34, %33 : vector<256x64xf32>
    %cst_15 = arith.constant 0.707106769 : f32
    %36 = vector.broadcast %cst_15 : f32 to vector<256x64xf32>
    %37 = arith.mulf %33, %36 : vector<256x64xf32>
    %38 = math.erf %37 : vector<256x64xf32>
    %cst_16 = arith.constant 1.000000e+00 : f32
    %39 = vector.broadcast %cst_16 : f32 to vector<256x64xf32>
    %40 = arith.addf %39, %38 : vector<256x64xf32>
    %41 = arith.mulf %35, %40 : vector<256x64xf32>
    %42 = arith.truncf %41 : vector<256x64xf32> to vector<256x64xbf16>
    %c0_17 = arith.constant 0 : index
    %c0_18 = arith.constant 0 : index
    %43 = vector.load %arg6[%c0_17, %c0_18] : memref<64x32xbf16, #tpu.memory_space<vmem>>, vector<64x32xbf16>
    %cst_19 = arith.constant dense<0.000000e+00> : vector<256x32xf32>
    %44 = tpu.matmul %42, %43, %cst_19 {dimension_numbers = #tpu.dot_dimension_numbers<[1], [0], [0], [1], [0, 0, 1, 1], [], []>} : vector<256x64xbf16>, vector<64x32xbf16>, vector<256x32xf32> -> vector<256x32xf32>
    %c0_20 = arith.constant 0 : index
    %c0_21 = arith.constant 0 : index
    %45 = vector.load %arg7[%c0_20, %c0_21] : memref<1x32xf32, #tpu.memory_space<vmem>>, vector<1x32xf32>
    %46 = vector.broadcast %45 : vector<1x32xf32> to vector<256x32xf32>
    %47 = arith.addf %44, %46 : vector<256x32xf32>
    %c0_22 = arith.constant 0 : index
    %c0_23 = arith.constant 0 : index
    %48 = vector.load %arg8[%c0_22, %c0_23] : memref<256x32xf32, #tpu.memory_space<vmem>>, vector<256x32xf32>
    tpu.vector_store %arg8[%c0_22, %c0_23], %47 {strides = array<i32>} : memref<256x32xf32, #tpu.memory_space<vmem>>, vector<256x32xf32>,
    return
  }
  func.func @transform_0(%arg0: i32) -> (i32, i32) {
    %c0_i32 = arith.constant 0 : i32
    %c0_i32_0 = arith.constant 0 : i32
    return %arg0, %c0_i32 : i32, i32
  }
  func.func @transform_1(%arg0: i32) -> (i32, i32) {
    %c0_i32 = arith.constant 0 : i32
    %c0_i32_0 = arith.constant 0 : i32
    %c0_i32_1 = arith.constant 0 : i32
    return %c0_i32, %c0_i32_0 : i32, i32
  }
  func.func @transform_2(%arg0: i32) -> (i32, i32) {
    %c0_i32 = arith.constant 0 : i32
    %c0_i32_0 = arith.constant 0 : i32
    %c0_i32_1 = arith.constant 0 : i32
    return %c0_i32, %c0_i32_0 : i32, i32
  }
  func.func @transform_3(%arg0: i32) -> (i32, i32) {
    %c0_i32 = arith.constant 0 : i32
    %c0_i32_0 = arith.constant 0 : i32
    %c0_i32_1 = arith.constant 0 : i32
    return %c0_i32, %c0_i32_0 : i32, i32
  }
  func.func @transform_4(%arg0: i32) -> (i32, i32) {
    %c0_i32 = arith.constant 0 : i32
    %c0_i32_0 = arith.constant 0 : i32
    %c0_i32_1 = arith.constant 0 : i32
    return %c0_i32, %c0_i32_0 : i32, i32
  }
  func.func @transform_5(%arg0: i32) -> (i32, i32) {
    %c0_i32 = arith.constant 0 : i32
    %c0_i32_0 = arith.constant 0 : i32
    %c0_i32_1 = arith.constant 0 : i32
    return %c0_i32, %c0_i32_0 : i32, i32
  }
  func.func @transform_6(%arg0: i32) -> (i32, i32) {
    %c0_i32 = arith.constant 0 : i32
    %c0_i32_0 = arith.constant 0 : i32
    %c0_i32_1 = arith.constant 0 : i32
    return %c0_i32, %c0_i32_0 : i32, i32
  }
  func.func @transform_7(%arg0: i32) -> (i32, i32) {
    %c0_i32 = arith.constant 0 : i32
    %c0_i32_0 = arith.constant 0 : i32
    return %arg0, %c0_i32 : i32, i32
  }
}

</mosaic_0001>

<llo_original>
// kernel: tpu_custom_call.1
$region0: #{tpu_custom_call.1}
  #allocation0 [shape = 'u32[]', space=smem, size = 0x4, offset = 0x4, fixed_abs, tag = 'smem constant byte address 0x4 - core index']
  #allocation1 [shape = 'u32[144,128]{1,0:T(1,128)}', space=vmem, size = 0x12000, scoped, tag = 'internal scratch']
  %s0 = inlined_call_operand.vmem [shape: bf16[256,32], index: 0, kind: input, shape index: {}]
  %s1 = inlined_call_operand.vmem [shape: f32[1,32], index: 1, kind: input, shape index: {}]
  %s2 = inlined_call_operand.vmem [shape: f32[1,32], index: 2, kind: input, shape index: {}]
  %s3 = inlined_call_operand.vmem [shape: bf16[32,64], index: 3, kind: input, shape index: {}]
  %s4 = inlined_call_operand.vmem [shape: f32[1,64], index: 4, kind: input, shape index: {}]
  %s5 = inlined_call_operand.vmem [shape: bf16[64,32], index: 5, kind: input, shape index: {}]
  %s6 = inlined_call_operand.vmem [shape: f32[1,32], index: 6, kind: input, shape index: {}]
  %s7 = inlined_call_operand.vmem [shape: f32[256,32], index: 7, kind: output, shape index: {}]
  %s8 = sld [smem:[#allocation0]]
  $region38: #{tpu_custom_call.1} parent=0
    _
  %s10 = ssub.s32 1, %s8
  %s11 = scalar_select 0, %s10, %s8
  // Predicated region
  $region2: #{tpu_custom_call.1} parent=0 // pred_check
    _
  $region3: #{tpu_custom_call.1} parent=0 // pred_check_branch
    %13 = sbr.rel (0) target = $region5
  $region4: #{tpu_custom_call.1} parent=0 // pred_region
    _
  $region5: #{tpu_custom_call.1} parent=0 // pred_fallthru
    _
  // Predicated region
  $region6: #{tpu_custom_call.1} parent=0 // pred_check
    _
  $region7: #{tpu_custom_call.1} parent=0 // pred_check_branch
    %15 = sbr.rel (0) target = $region9
  $region8: #{tpu_custom_call.1} parent=0 // pred_region
    _
  $region9: #{tpu_custom_call.1} parent=0 // pred_fallthru
    _
  // Predicated region
  $region10: #{tpu_custom_call.1} parent=0 // pred_check
    _
  $region11: #{tpu_custom_call.1} parent=0 // pred_check_branch
    %17 = sbr.rel (0) target = $region13
  $region12: #{tpu_custom_call.1} parent=0 // pred_region
    _
  $region13: #{tpu_custom_call.1} parent=0 // pred_fallthru
    _
  // Predicated region
  $region14: #{tpu_custom_call.1} parent=0 // pred_check
    _
  $region15: #{tpu_custom_call.1} parent=0 // pred_check_branch
    %19 = sbr.rel (0) target = $region17
  $region16: #{tpu_custom_call.1} parent=0 // pred_region
    _
  $region17: #{tpu_custom_call.1} parent=0 // pred_fallthru
    _
  // Predicated region
  $region18: #{tpu_custom_call.1} parent=0 // pred_check
    _
  $region19: #{tpu_custom_call.1} parent=0 // pred_check_branch
    %21 = sbr.rel (0) target = $region21
  $region20: #{tpu_custom_call.1} parent=0 // pred_region
    _
  $region21: #{tpu_custom_call.1} parent=0 // pred_fallthru
    _
  // Predicated region
  $region22: #{tpu_custom_call.1} parent=0 // pred_check
    _
  $region23: #{tpu_custom_call.1} parent=0 // pred_check_branch
    %23 = sbr.rel (0) target = $region25
  $region24: #{tpu_custom_call.1} parent=0 // pred_region
    _
  $region25: #{tpu_custom_call.1} parent=0 // pred_fallthru
    _
  // Predicated region
  $region26: #{tpu_custom_call.1} parent=0 // pred_check
    _
  $region27: #{tpu_custom_call.1} parent=0 // pred_check_branch
    %25 = sbr.rel (0) target = $region29
  $region28: #{tpu_custom_call.1} parent=0 // pred_region
    _
  $region29: #{tpu_custom_call.1} parent=0 // pred_fallthru
    _
  %v27 = vld [vmem:[%s0] sm:$0xf]
  %v28 = vld [vmem:[%s0 + $0x4] sm:$0xf]
  %v29 = vld [vmem:[%s0 + $0x8] sm:$0xf]
  %v30 = vld [vmem:[%s0 + $0xc] sm:$0xf]
  %v31 = vld [vmem:[%s0 + $0x10] sm:$0xf]
  %v32 = vld [vmem:[%s0 + $0x14] sm:$0xf]
  %v33 = vld [vmem:[%s0 + $0x18] sm:$0xf]
  %v34 = vld [vmem:[%s0 + $0x1c] sm:$0xf]
  %v35 = vld [vmem:[%s0 + $0x20] sm:$0xf]
  %v36 = vld [vmem:[%s0 + $0x24] sm:$0xf]
  %v37 = vld [vmem:[%s0 + $0x28] sm:$0xf]
  %v38 = vld [vmem:[%s0 + $0x2c] sm:$0xf]
  %v39 = vld [vmem:[%s0 + $0x30] sm:$0xf]
  %v40 = vld [vmem:[%s0 + $0x34] sm:$0xf]
  %v41 = vld [vmem:[%s0 + $0x38] sm:$0xf]
  %v42 = vld [vmem:[%s0 + $0x3c] sm:$0xf]
  %v43 = vld [vmem:[%s0 + $0x40] sm:$0xf]
  %v44 = vld [vmem:[%s0 + $0x44] sm:$0xf]
  %v45 = vld [vmem:[%s0 + $0x48] sm:$0xf]
  %v46 = vld [vmem:[%s0 + $0x4c] sm:$0xf]
  %v47 = vld [vmem:[%s0 + $0x50] sm:$0xf]
  %v48 = vld [vmem:[%s0 + $0x54] sm:$0xf]
  %v49 = vld [vmem:[%s0 + $0x58] sm:$0xf]
  %v50 = vld [vmem:[%s0 + $0x5c] sm:$0xf]
  %v51 = vld [vmem:[%s0 + $0x60] sm:$0xf]
  %v52 = vld [vmem:[%s0 + $0x64] sm:$0xf]
  %v53 = vld [vmem:[%s0 + $0x68] sm:$0xf]
  %v54 = vld [vmem:[%s0 + $0x6c] sm:$0xf]
  %v55 = vld [vmem:[%s0 + $0x70] sm:$0xf]
  %v56 = vld [vmem:[%s0 + $0x74] sm:$0xf]
  %v57 = vld [vmem:[%s0 + $0x78] sm:$0xf]
  %v58 = vld [vmem:[%s0 + $0x7c] sm:$0xf]
  %v59 = vunpack.c.l.bf16 %v27
  %v60 = vunpack.c.l.bf16 %v28
  %v61 = vunpack.c.l.bf16 %v29
  %v62 = vunpack.c.l.bf16 %v30
  %v63 = vunpack.c.l.bf16 %v31
  %v64 = vunpack.c.l.bf16 %v32
  %v65 = vunpack.c.l.bf16 %v33
  %v66 = vunpack.c.l.bf16 %v34
  %v67 = vunpack.c.l.bf16 %v35
  %v68 = vunpack.c.l.bf16 %v36
  %v69 = vunpack.c.l.bf16 %v37
  %v70 = vunpack.c.l.bf16 %v38
  %v71 = vunpack.c.l.bf16 %v39
  %v72 = vunpack.c.l.bf16 %v40
  %v73 = vunpack.c.l.bf16 %v41
  %v74 = vunpack.c.l.bf16 %v42
  %v75 = vunpack.c.l.bf16 %v43
  %v76 = vunpack.c.l.bf16 %v44
  %v77 = vunpack.c.l.bf16 %v45
  %v78 = vunpack.c.l.bf16 %v46
  %v79 = vunpack.c.l.bf16 %v47
  %v80 = vunpack.c.l.bf16 %v48
  %v81 = vunpack.c.l.bf16 %v49
  %v82 = vunpack.c.l.bf16 %v50
  %v83 = vunpack.c.l.bf16 %v51
  %v84 = vunpack.c.l.bf16 %v52
  %v85 = vunpack.c.l.bf16 %v53
  %v86 = vunpack.c.l.bf16 %v54
  %v87 = vunpack.c.l.bf16 %v55
  %v88 = vunpack.c.l.bf16 %v56
  %v89 = vunpack.c.l.bf16 %v57
  %v90 = vunpack.c.l.bf16 %v58
  %vm91 = vcmask 261120
  %v92 = vsel %vm91, %v59, 0.0
  %93 = vadd.xlane.f32.xlu0 %v92
  %v94 = vpop.xlane.xlu0 %93
  %v95 = vsel %vm91, %v60, 0.0
  %96 = vadd.xlane.f32.xlu0 %v95
  %v97 = vpop.xlane.xlu0 %96
  %v98 = vsel %vm91, %v61, 0.0
  %99 = vadd.xlane.f32.xlu0 %v98
  %v100 = vpop.xlane.xlu0 %99
  %v101 = vsel %vm91, %v62, 0.0
  %102 = vadd.xlane.f32.xlu0 %v101
  %v103 = vpop.xlane.xlu0 %102
  %v104 = vsel %vm91, %v63, 0.0
  %105 = vadd.xlane.f32.xlu0 %v104
  %v106 = vpop.xlane.xlu0 %105
  %v107 = vsel %vm91, %v64, 0.0
  %108 = vadd.xlane.f32.xlu0 %v107
  %v109 = vpop.xlane.xlu0 %108
  %v110 = vsel %vm91, %v65, 0.0
  %111 = vadd.xlane.f32.xlu0 %v110
  %v112 = vpop.xlane.xlu0 %111
  %v113 = vsel %vm91, %v66, 0.0
  %114 = vadd.xlane.f32.xlu0 %v113
  %v115 = vpop.xlane.xlu0 %114
  %v116 = vsel %vm91, %v67, 0.0
  %117 = vadd.xlane.f32.xlu0 %v116
  %v118 = vpop.xlane.xlu0 %117
  %v119 = vsel %vm91, %v68, 0.0
  %120 = vadd.xlane.f32.xlu0 %v119
  %v121 = vpop.xlane.xlu0 %120
  %v122 = vsel %vm91, %v69, 0.0
  %123 = vadd.xlane.f32.xlu0 %v122
  %v124 = vpop.xlane.xlu0 %123
  %v125 = vsel %vm91, %v70, 0.0
  %126 = vadd.xlane.f32.xlu0 %v125
  %v127 = vpop.xlane.xlu0 %126
  %v128 = vsel %vm91, %v71, 0.0
  %129 = vadd.xlane.f32.xlu0 %v128
  %v130 = vpop.xlane.xlu0 %129
  %v131 = vsel %vm91, %v72, 0.0
  %132 = vadd.xlane.f32.xlu0 %v131
  %v133 = vpop.xlane.xlu0 %132
  %v134 = vsel %vm91, %v73, 0.0
  %135 = vadd.xlane.f32.xlu0 %v134
  %v136 = vpop.xlane.xlu0 %135
  %v137 = vsel %vm91, %v74, 0.0
  %138 = vadd.xlane.f32.xlu0 %v137
  %v139 = vpop.xlane.xlu0 %138
  %v140 = vsel %vm91, %v75, 0.0
  %141 = vadd.xlane.f32.xlu0 %v140
  %v142 = vpop.xlane.xlu0 %141
  %v143 = vsel %vm91, %v76, 0.0
  %144 = vadd.xlane.f32.xlu0 %v143
  %v145 = vpop.xlane.xlu0 %144
  %v146 = vsel %vm91, %v77, 0.0
  %147 = vadd.xlane.f32.xlu0 %v146
  %v148 = vpop.xlane.xlu0 %147
  %v149 = vsel %vm91, %v78, 0.0
  %150 = vadd.xlane.f32.xlu0 %v149
  %v151 = vpop.xlane.xlu0 %150
  %v152 = vsel %vm91, %v79, 0.0
  %153 = vadd.xlane.f32.xlu0 %v152
  %v154 = vpop.xlane.xlu0 %153
  %v155 = vsel %vm91, %v80, 0.0
  %156 = vadd.xlane.f32.xlu0 %v155
  %v157 = vpop.xlane.xlu0 %156
  %v158 = vsel %vm91, %v81, 0.0
  %159 = vadd.xlane.f32.xlu0 %v158
  %v160 = vpop.xlane.xlu0 %159
  %v161 = vsel %vm91, %v82, 0.0
  %162 = vadd.xlane.f32.xlu0 %v161
  %v163 = vpop.xlane.xlu0 %162
  %v164 = vsel %vm91, %v83, 0.0
  %165 = vadd.xlane.f32.xlu0 %v164
  %v166 = vpop.xlane.xlu0 %165
  %v167 = vsel %vm91, %v84, 0.0
  %168 = vadd.xlane.f32.xlu0 %v167
  %v169 = vpop.xlane.xlu0 %168
  %v170 = vsel %vm91, %v85, 0.0
  %171 = vadd.xlane.f32.xlu0 %v170
  %v172 = vpop.xlane.xlu0 %171
  %v173 = vsel %vm91, %v86, 0.0
  %174 = vadd.xlane.f32.xlu0 %v173
  %v175 = vpop.xlane.xlu0 %174
  %v176 = vsel %vm91, %v87, 0.0
  %177 = vadd.xlane.f32.xlu0 %v176
  %v178 = vpop.xlane.xlu0 %177
  %v179 = vsel %vm91, %v88, 0.0
  %180 = vadd.xlane.f32.xlu0 %v179
  %v181 = vpop.xlane.xlu0 %180
  %v182 = vsel %vm91, %v89, 0.0
  %183 = vadd.xlane.f32.xlu0 %v182
  %v184 = vpop.xlane.xlu0 %183
  %v185 = vsel %vm91, %v90, 0.0
  %186 = vadd.xlane.f32.xlu0 %v185
  %v187 = vpop.xlane.xlu0 %186
  %v188 = vrcp.pop 32.0
  %v189 = vmul.f32 %v94, %v188
  %v190 = vmul.f32 %v97, %v188
  %v191 = vmul.f32 %v100, %v188
  %v192 = vmul.f32 %v103, %v188
  %v193 = vmul.f32 %v106, %v188
  %v194 = vmul.f32 %v109, %v188
  %v195 = vmul.f32 %v112, %v188
  %v196 = vmul.f32 %v115, %v188
  %v197 = vmul.f32 %v118, %v188
  %v198 = vmul.f32 %v121, %v188
  %v199 = vmul.f32 %v124, %v188
  %v200 = vmul.f32 %v127, %v188
  %v201 = vmul.f32 %v130, %v188
  %v202 = vmul.f32 %v133, %v188
  %v203 = vmul.f32 %v136, %v188
  %v204 = vmul.f32 %v139, %v188
  %v205 = vmul.f32 %v142, %v188
  %v206 = vmul.f32 %v145, %v188
  %v207 = vmul.f32 %v148, %v188
  %v208 = vmul.f32 %v151, %v188
  %v209 = vmul.f32 %v154, %v188
  %v210 = vmul.f32 %v157, %v188
  %v211 = vmul.f32 %v160, %v188
  %v212 = vmul.f32 %v163, %v188
  %v213 = vmul.f32 %v166, %v188
  %v214 = vmul.f32 %v169, %v188
  %v215 = vmul.f32 %v172, %v188
  %v216 = vmul.f32 %v175, %v188
  %v217 = vmul.f32 %v178, %v188
  %v218 = vmul.f32 %v181, %v188
  %v219 = vmul.f32 %v184, %v188
  %v220 = vmul.f32 %v187, %v188
  %v221 = vsub.f32 %v59, %v189
  %v222 = vsub.f32 %v60, %v190
  %v223 = vsub.f32 %v61, %v191
  %v224 = vsub.f32 %v62, %v192
  %v225 = vsub.f32 %v63, %v193
  %v226 = vsub.f32 %v64, %v194
  %v227 = vsub.f32 %v65, %v195
  %v228 = vsub.f32 %v66, %v196
  %v229 = vsub.f32 %v67, %v197
  %v230 = vsub.f32 %v68, %v198
  %v231 = vsub.f32 %v69, %v199
  %v232 = vsub.f32 %v70, %v200
  %v233 = vsub.f32 %v71, %v201
  %v234 = vsub.f32 %v72, %v202
  %v235 = vsub.f32 %v73, %v203
  %v236 = vsub.f32 %v74, %v204
  %v237 = vsub.f32 %v75, %v205
  %v238 = vsub.f32 %v76, %v206
  %v239 = vsub.f32 %v77, %v207
  %v240 = vsub.f32 %v78, %v208
  %v241 = vsub.f32 %v79, %v209
  %v242 = vsub.f32 %v80, %v210
  %v243 = vsub.f32 %v81, %v211
  %v244 = vsub.f32 %v82, %v212
  %v245 = vsub.f32 %v83, %v213
  %v246 = vsub.f32 %v84, %v214
  %v247 = vsub.f32 %v85, %v215
  %v248 = vsub.f32 %v86, %v216
  %v249 = vsub.f32 %v87, %v217
  %v250 = vsub.f32 %v88, %v218
  %v251 = vsub.f32 %v89, %v219
  %v252 = vsub.f32 %v90, %v220
  %v253 = vmul.f32 %v221, %v221
  %v254 = vmul.f32 %v222, %v222
  %v255 = vmul.f32 %v223, %v223
  %v256 = vmul.f32 %v224, %v224
  %v257 = vmul.f32 %v225, %v225
  %v258 = vmul.f32 %v226, %v226
  %v259 = vmul.f32 %v227, %v227
  %v260 = vmul.f32 %v228, %v228
  %v261 = vmul.f32 %v229, %v229
  %v262 = vmul.f32 %v230, %v230
  %v263 = vmul.f32 %v231, %v231
  %v264 = vmul.f32 %v232, %v232
  %v265 = vmul.f32 %v233, %v233
  %v266 = vmul.f32 %v234, %v234
  %v267 = vmul.f32 %v235, %v235
  %v268 = vmul.f32 %v236, %v236
  %v269 = vmul.f32 %v237, %v237
  %v270 = vmul.f32 %v238, %v238
  %v271 = vmul.f32 %v239, %v239
  %v272 = vmul.f32 %v240, %v240
  %v273 = vmul.f32 %v241, %v241
  %v274 = vmul.f32 %v242, %v242
  %v275 = vmul.f32 %v243, %v243
  %v276 = vmul.f32 %v244, %v244
  %v277 = vmul.f32 %v245, %v245
  %v278 = vmul.f32 %v246, %v246
  %v279 = vmul.f32 %v247, %v247
  %v280 = vmul.f32 %v248, %v248
  %v281 = vmul.f32 %v249, %v249
  %v282 = vmul.f32 %v250, %v250
  %v283 = vmul.f32 %v251, %v251
  %v284 = vmul.f32 %v252, %v252
  %v285 = vsel %vm91, %v253, 0.0
  %286 = vadd.xlane.f32.xlu0 %v285
  %v287 = vpop.xlane.xlu0 %286
  %v288 = vsel %vm91, %v254, 0.0
  %289 = vadd.xlane.f32.xlu0 %v288
  %v290 = vpop.xlane.xlu0 %289
  %v291 = vsel %vm91, %v255, 0.0
  %292 = vadd.xlane.f32.xlu0 %v291
  %v293 = vpop.xlane.xlu0 %292
  %v294 = vsel %vm91, %v256, 0.0
  %295 = vadd.xlane.f32.xlu0 %v294
  %v296 = vpop.xlane.xlu0 %295
  %v297 = vsel %vm91, %v257, 0.0
  %298 = vadd.xlane.f32.xlu0 %v297
  %v299 = vpop.xlane.xlu0 %298
  %v300 = vsel %vm91, %v258, 0.0
  %301 = vadd.xlane.f32.xlu0 %v300
  %v302 = vpop.xlane.xlu0 %301
  %v303 = vsel %vm91, %v259, 0.0
  %304 = vadd.xlane.f32.xlu0 %v303
  %v305 = vpop.xlane.xlu0 %304
  %v306 = vsel %vm91, %v260, 0.0
  %307 = vadd.xlane.f32.xlu0 %v306
  %v308 = vpop.xlane.xlu0 %307
  %v309 = vsel %vm91, %v261, 0.0
  %310 = vadd.xlane.f32.xlu0 %v309
  %v311 = vpop.xlane.xlu0 %310
  %v312 = vsel %vm91, %v262, 0.0
  %313 = vadd.xlane.f32.xlu0 %v312
  %v314 = vpop.xlane.xlu0 %313
  %v315 = vsel %vm91, %v263, 0.0
  %316 = vadd.xlane.f32.xlu0 %v315
  %v317 = vpop.xlane.xlu0 %316
  %v318 = vsel %vm91, %v264, 0.0
  %319 = vadd.xlane.f32.xlu0 %v318
  %v320 = vpop.xlane.xlu0 %319
  %v321 = vsel %vm91, %v265, 0.0
  %322 = vadd.xlane.f32.xlu0 %v321
  %v323 = vpop.xlane.xlu0 %322
  %v324 = vsel %vm91, %v266, 0.0
  %325 = vadd.xlane.f32.xlu0 %v324
  %v326 = vpop.xlane.xlu0 %325
  %v327 = vsel %vm91, %v267, 0.0
  %328 = vadd.xlane.f32.xlu0 %v327
  %v329 = vpop.xlane.xlu0 %328
  %v330 = vsel %vm91, %v268, 0.0
  %331 = vadd.xlane.f32.xlu0 %v330
  %v332 = vpop.xlane.xlu0 %331
  %v333 = vsel %vm91, %v269, 0.0
  %334 = vadd.xlane.f32.xlu0 %v333
  %v335 = vpop.xlane.xlu0 %334
  %v336 = vsel %vm91, %v270, 0.0
  %337 = vadd.xlane.f32.xlu0 %v336
  %v338 = vpop.xlane.xlu0 %337
  %v339 = vsel %vm91, %v271, 0.0
  %340 = vadd.xlane.f32.xlu0 %v339
  %v341 = vpop.xlane.xlu0 %340
  %v342 = vsel %vm91, %v272, 0.0
  %343 = vadd.xlane.f32.xlu0 %v342
  %v344 = vpop.xlane.xlu0 %343
  %v345 = vsel %vm91, %v273, 0.0
  %346 = vadd.xlane.f32.xlu0 %v345
  %v347 = vpop.xlane.xlu0 %346
  %v348 = vsel %vm91, %v274, 0.0
  %349 = vadd.xlane.f32.xlu0 %v348
  %v350 = vpop.xlane.xlu0 %349
  %v351 = vsel %vm91, %v275, 0.0
  %352 = vadd.xlane.f32.xlu0 %v351
  %v353 = vpop.xlane.xlu0 %352
  %v354 = vsel %vm91, %v276, 0.0
  %355 = vadd.xlane.f32.xlu0 %v354
  %v356 = vpop.xlane.xlu0 %355
  %v357 = vsel %vm91, %v277, 0.0
  %358 = vadd.xlane.f32.xlu0 %v357
  %v359 = vpop.xlane.xlu0 %358
  %v360 = vsel %vm91, %v278, 0.0
  %361 = vadd.xlane.f32.xlu0 %v360
  %v362 = vpop.xlane.xlu0 %361
  %v363 = vsel %vm91, %v279, 0.0
  %364 = vadd.xlane.f32.xlu0 %v363
  %v365 = vpop.xlane.xlu0 %364
  %v366 = vsel %vm91, %v280, 0.0
  %367 = vadd.xlane.f32.xlu0 %v366
  %v368 = vpop.xlane.xlu0 %367
  %v369 = vsel %vm91, %v281, 0.0
  %370 = vadd.xlane.f32.xlu0 %v369
  %v371 = vpop.xlane.xlu0 %370
  %v372 = vsel %vm91, %v282, 0.0
  %373 = vadd.xlane.f32.xlu0 %v372
  %v374 = vpop.xlane.xlu0 %373
  %v375 = vsel %vm91, %v283, 0.0
  %376 = vadd.xlane.f32.xlu0 %v375
  %v377 = vpop.xlane.xlu0 %376
  %v378 = vsel %vm91, %v284, 0.0
  %379 = vadd.xlane.f32.xlu0 %v378
  %v380 = vpop.xlane.xlu0 %379
  %v381 = vmul.f32 %v287, %v188
  %v382 = vmul.f32 %v290, %v188
  %v383 = vmul.f32 %v293, %v188
  %v384 = vmul.f32 %v296, %v188
  %v385 = vmul.f32 %v299, %v188
  %v386 = vmul.f32 %v302, %v188
  %v387 = vmul.f32 %v305, %v188
  %v388 = vmul.f32 %v308, %v188
  %v389 = vmul.f32 %v311, %v188
  %v390 = vmul.f32 %v314, %v188
  %v391 = vmul.f32 %v317, %v188
  %v392 = vmul.f32 %v320, %v188
  %v393 = vmul.f32 %v323, %v188
  %v394 = vmul.f32 %v326, %v188
  %v395 = vmul.f32 %v329, %v188
  %v396 = vmul.f32 %v332, %v188
  %v397 = vmul.f32 %v335, %v188
  %v398 = vmul.f32 %v338, %v188
  %v399 = vmul.f32 %v341, %v188
  %v400 = vmul.f32 %v344, %v188
  %v401 = vmul.f32 %v347, %v188
  %v402 = vmul.f32 %v350, %v188
  %v403 = vmul.f32 %v353, %v188
  %v404 = vmul.f32 %v356, %v188
  %v405 = vmul.f32 %v359, %v188
  %v406 = vmul.f32 %v362, %v188
  %v407 = vmul.f32 %v365, %v188
  %v408 = vmul.f32 %v368, %v188
  %v409 = vmul.f32 %v371, %v188
  %v410 = vmul.f32 %v374, %v188
  %v411 = vmul.f32 %v377, %v188
  %v412 = vmul.f32 %v380, %v188
  %v413 = vadd.f32 %v381, 1e-05
  %v414 = vadd.f32 %v382, 1e-05
  %v415 = vadd.f32 %v383, 1e-05
  %v416 = vadd.f32 %v384, 1e-05
  %v417 = vadd.f32 %v385, 1e-05
  %v418 = vadd.f32 %v386, 1e-05
  %v419 = vadd.f32 %v387, 1e-05
  %v420 = vadd.f32 %v388, 1e-05
  %v421 = vadd.f32 %v389, 1e-05
  %v422 = vadd.f32 %v390, 1e-05
  %v423 = vadd.f32 %v391, 1e-05
  %v424 = vadd.f32 %v392, 1e-05
  %v425 = vadd.f32 %v393, 1e-05
  %v426 = vadd.f32 %v394, 1e-05
  %v427 = vadd.f32 %v395, 1e-05
  %v428 = vadd.f32 %v396, 1e-05
  %v429 = vadd.f32 %v397, 1e-05
  %v430 = vadd.f32 %v398, 1e-05
  %v431 = vadd.f32 %v399, 1e-05
  %v432 = vadd.f32 %v400, 1e-05
  %v433 = vadd.f32 %v401, 1e-05
  %v434 = vadd.f32 %v402, 1e-05
  %v435 = vadd.f32 %v403, 1e-05
  %v436 = vadd.f32 %v404, 1e-05
  %v437 = vadd.f32 %v405, 1e-05
  %v438 = vadd.f32 %v406, 1e-05
  %v439 = vadd.f32 %v407, 1e-05
  %v440 = vadd.f32 %v408, 1e-05
  %v441 = vadd.f32 %v409, 1e-05
  %v442 = vadd.f32 %v410, 1e-05
  %v443 = vadd.f32 %v411, 1e-05
  %v444 = vadd.f32 %v412, 1e-05
  %v445 = vrsqrt.pop %v413
  %v446 = vrsqrt.pop %v414
  %v447 = vrsqrt.pop %v415
  %v448 = vrsqrt.pop %v416
  %v449 = vrsqrt.pop %v417
  %v450 = vrsqrt.pop %v418
  %v451 = vrsqrt.pop %v419
  %v452 = vrsqrt.pop %v420
  %v453 = vrsqrt.pop %v421
  %v454 = vrsqrt.pop %v422
  %v455 = vrsqrt.pop %v423
  %v456 = vrsqrt.pop %v424
  %v457 = vrsqrt.pop %v425
  %v458 = vrsqrt.pop %v426
  %v459 = vrsqrt.pop %v427
  %v460 = vrsqrt.pop %v428
  %v461 = vrsqrt.pop %v429
  %v462 = vrsqrt.pop %v430
  %v463 = vrsqrt.pop %v431
  %v464 = vrsqrt.pop %v432
  %v465 = vrsqrt.pop %v433
  %v466 = vrsqrt.pop %v434
  %v467 = vrsqrt.pop %v435
  %v468 = vrsqrt.pop %v436
  %v469 = vrsqrt.pop %v437
  %v470 = vrsqrt.pop %v438
  %v471 = vrsqrt.pop %v439
  %v472 = vrsqrt.pop %v440
  %v473 = vrsqrt.pop %v441
  %v474 = vrsqrt.pop %v442
  %v475 = vrsqrt.pop %v443
  %v476 = vrsqrt.pop %v444
  %v477 = vmul.f32 %v221, %v445
  %v478 = vmul.f32 %v222, %v446
  %v479 = vmul.f32 %v223, %v447
  %v480 = vmul.f32 %v224, %v448
  %v481 = vmul.f32 %v225, %v449
  %v482 = vmul.f32 %v226, %v450
  %v483 = vmul.f32 %v227, %v451
  %v484 = vmul.f32 %v228, %v452
  %v485 = vmul.f32 %v229, %v453
  %v486 = vmul.f32 %v230, %v454
  %v487 = vmul.f32 %v231, %v455
  %v488 = vmul.f32 %v232, %v456
  %v489 = vmul.f32 %v233, %v457
  %v490 = vmul.f32 %v234, %v458
  %v491 = vmul.f32 %v235, %v459
  %v492 = vmul.f32 %v236, %v460
  %v493 = vmul.f32 %v237, %v461
  %v494 = vmul.f32 %v238, %v462
  %v495 = vmul.f32 %v239, %v463
  %v496 = vmul.f32 %v240, %v464
  %v497 = vmul.f32 %v241, %v465
  %v498 = vmul.f32 %v242, %v466
  %v499 = vmul.f32 %v243, %v467
  %v500 = vmul.f32 %v244, %v468
  %v501 = vmul.f32 %v245, %v469
  %v502 = vmul.f32 %v246, %v470
  %v503 = vmul.f32 %v247, %v471
  %v504 = vmul.f32 %v248, %v472
  %v505 = vmul.f32 %v249, %v473
  %v506 = vmul.f32 %v250, %v474
  %v507 = vmul.f32 %v251, %v475
  %v508 = vmul.f32 %v252, %v476
  %v509 = vld [vmem:[%s1] sm:$0x1]
  %v511 = vlaneseq
  %v512 = vshrl.u32 %v511, 7
  %v513 = vsub.s32 0, %v512
  %v514 = vrot.slane %v509, %v513
  %v516 = vmul.f32 %v477, %v514
  %v517 = vmul.f32 %v478, %v514
  %v518 = vmul.f32 %v479, %v514
  %v519 = vmul.f32 %v480, %v514
  %v520 = vmul.f32 %v481, %v514
  %v521 = vmul.f32 %v482, %v514
  %v522 = vmul.f32 %v483, %v514
  %v523 = vmul.f32 %v484, %v514
  %v524 = vmul.f32 %v485, %v514
  %v525 = vmul.f32 %v486, %v514
  %v526 = vmul.f32 %v487, %v514
  %v527 = vmul.f32 %v488, %v514
  %v528 = vmul.f32 %v489, %v514
  %v529 = vmul.f32 %v490, %v514
  %v530 = vmul.f32 %v491, %v514
  %v531 = vmul.f32 %v492, %v514
  %v532 = vmul.f32 %v493, %v514
  %v533 = vmul.f32 %v494, %v514
  %v534 = vmul.f32 %v495, %v514
  %v535 = vmul.f32 %v496, %v514
  %v536 = vmul.f32 %v497, %v514
  %v537 = vmul.f32 %v498, %v514
  %v538 = vmul.f32 %v499, %v514
  %v539 = vmul.f32 %v500, %v514
  %v540 = vmul.f32 %v501, %v514
  %v541 = vmul.f32 %v502, %v514
  %v542 = vmul.f32 %v503, %v514
  %v543 = vmul.f32 %v504, %v514
  %v544 = vmul.f32 %v505, %v514
  %v545 = vmul.f32 %v506, %v514
  %v546 = vmul.f32 %v507, %v514
  %v547 = vmul.f32 %v508, %v514
  %v548 = vld [vmem:[%s2] sm:$0x1]
  %v550 = vlaneseq
  %v551 = vshrl.u32 %v550, 7
  %v552 = vsub.s32 0, %v551
  %v553 = vrot.slane %v548, %v552
  %v555 = vadd.f32 %v516, %v553
  %v556 = vadd.f32 %v517, %v553
  %v557 = vadd.f32 %v518, %v553
  %v558 = vadd.f32 %v519, %v553
  %v559 = vadd.f32 %v520, %v553
  %v560 = vadd.f32 %v521, %v553
  %v561 = vadd.f32 %v522, %v553
  %v562 = vadd.f32 %v523, %v553
  %v563 = vadd.f32 %v524, %v553
  %v564 = vadd.f32 %v525, %v553
  %v565 = vadd.f32 %v526, %v553
  %v566 = vadd.f32 %v527, %v553
  %v567 = vadd.f32 %v528, %v553
  %v568 = vadd.f32 %v529, %v553
  %v569 = vadd.f32 %v530, %v553
  %v570 = vadd.f32 %v531, %v553
  %v571 = vadd.f32 %v532, %v553
  %v572 = vadd.f32 %v533, %v553
  %v573 = vadd.f32 %v534, %v553
  %v574 = vadd.f32 %v535, %v553
  %v575 = vadd.f32 %v536, %v553
  %v576 = vadd.f32 %v537, %v553
  %v577 = vadd.f32 %v538, %v553
  %v578 = vadd.f32 %v539, %v553
  %v579 = vadd.f32 %v540, %v553
  %v580 = vadd.f32 %v541, %v553
  %v581 = vadd.f32 %v542, %v553
  %v582 = vadd.f32 %v543, %v553
  %v583 = vadd.f32 %v544, %v553
  %v584 = vadd.f32 %v545, %v553
  %v585 = vadd.f32 %v546, %v553
  %v586 = vadd.f32 %v547, %v553
  %v587 = vpack.c.bf16 %v556, %v555
  %v588 = vpack.c.bf16 %v558, %v557
  %v589 = vpack.c.bf16 %v560, %v559
  %v590 = vpack.c.bf16 %v562, %v561
  %v591 = vpack.c.bf16 %v564, %v563
  %v592 = vpack.c.bf16 %v566, %v565
  %v593 = vpack.c.bf16 %v568, %v567
  %v594 = vpack.c.bf16 %v570, %v569
  %v595 = vpack.c.bf16 %v572, %v571
  %v596 = vpack.c.bf16 %v574, %v573
  %v597 = vpack.c.bf16 %v576, %v575
  %v598 = vpack.c.bf16 %v578, %v577
  %v599 = vpack.c.bf16 %v580, %v579
  %v600 = vpack.c.bf16 %v582, %v581
  %v601 = vpack.c.bf16 %v584, %v583
  %v602 = vpack.c.bf16 %v586, %v585
  %v603 = vld [vmem:[%s3] sm:$0xf]
  %v604 = vld [vmem:[%s3 + $0x4] sm:$0xf]
  %v605 = vld [vmem:[%s3 + $0x8] sm:$0xf]
  %v606 = vld [vmem:[%s3 + $0xc] sm:$0xf]
  %v607 = vld [vmem:[%s4] sm:$0x1]
  %v609 = vlaneseq
  %v610 = vshrl.u32 %v609, 7
  %v611 = vsub.s32 0, %v610
  %v612 = vrot.slane %v607, %v611
  %v618 = vunpack.c.l.b16 %v603
  %v619 = vunpack.c.l.b16 %v604
  %v620 = vunpack.c.l.b16 %v605
  %v621 = vunpack.c.l.b16 %v606
  %v622 = vpack.c.b16 %v619, %v618
  %v623 = vpack.c.b16 %v621, %v620
  %v627 = vsel %vm91, %v587, 0
  %v630 = vsel %vm91, %v588, 0
  %v633 = vsel %vm91, %v589, 0
  %v636 = vsel %vm91, %v590, 0
  %v639 = vsel %vm91, %v591, 0
  %v642 = vsel %vm91, %v592, 0
  %v645 = vsel %vm91, %v593, 0
  %v648 = vsel %vm91, %v594, 0
  %v651 = vsel %vm91, %v595, 0
  %v654 = vsel %vm91, %v596, 0
  %v657 = vsel %vm91, %v597, 0
  %v660 = vsel %vm91, %v598, 0
  %v663 = vsel %vm91, %v599, 0
  %v666 = vsel %vm91, %v600, 0
  %v669 = vsel %vm91, %v601, 0
  %v672 = vsel %vm91, %v602, 0
  %674 = vmatprep.subr.bf16.mxu0 0
  %675 = vmatpush1.bf16.msra.mxu0 0
  %676 = vmatprep.subr.bf16.mxu0 0
  %677 = vmatpush1.bf16.msra.mxu0 0
  %678 = vmatprep.subr.bf16.mxu0 0
  %679 = vmatpush1.bf16.msra.mxu0 0
  %680 = vmatprep.subr.bf16.mxu0 0
  %681 = vmatpush1.bf16.msra.mxu0 0
  %682 = vmatprep.subr.bf16.mxu0 0
  %683 = vmatpush1.bf16.msra.mxu0 0
  %684 = vmatprep.subr.bf16.mxu0 0
  %685 = vmatpush1.bf16.msra.mxu0 0
  %686 = vmatprep.subr.bf16.mxu0 0
  %687 = vmatpush1.bf16.msra.mxu0 %v623
  %688 = vmatprep.subr.bf16.mxu0 0
  %689 = vmatpush1.bf16.msra.mxu0 %v622
  %690 = vmatprep.subr.bf16.mxu0 0
  %691 = vmatpush2.bf16.msra.mxu0 0
  %692 = vmatprep.subr.bf16.mxu0 0
  %693 = vmatpush2.bf16.msra.mxu0 0
  %694 = vmatprep.subr.bf16.mxu0 0
  %695 = vmatpush2.bf16.msra.mxu0 0
  %696 = vmatprep.subr.bf16.mxu0 0
  %697 = vmatpush2.bf16.msra.mxu0 0
  %698 = vmatprep.subr.bf16.mxu0 0
  %699 = vmatpush2.bf16.msra.mxu0 0
  %700 = vmatprep.subr.bf16.mxu0 0
  %701 = vmatpush2.bf16.msra.mxu0 0
  %702 = vmatprep.subr.bf16.mxu0 0
  %703 = vmatpush2.bf16.msra.mxu0 0
  %704 = vmatprep.subr.bf16.mxu0 0
  %705 = vmatpush2.bf16.msra.mxu0 0
  %706 = vmatprep.mubr.bf16.mxu0 0
  %707 = vmatmul.mubr.bf16.gmra.mxu0 %v627
  %v708 = vpop.f32.mrf.mxu0
  %v709 = vadd.f32 %v612, %v708
  %v710 = vpop.f32.mrf.mxu0
  %v711 = vpop.f32.mrf.mxu0
  %v712 = vadd.f32 %v612, %v711
  %v713 = vpop.f32.mrf.mxu0
  %714 = vmatprep.mubr.bf16.mxu0 0
  %715 = vmatmul.mubr.bf16.gmra.mxu0 %v630
  %v716 = vpop.f32.mrf.mxu0
  %v717 = vadd.f32 %v612, %v716
  %v718 = vpop.f32.mrf.mxu0
  %v719 = vpop.f32.mrf.mxu0
  %v720 = vadd.f32 %v612, %v719
  %v721 = vpop.f32.mrf.mxu0
  %722 = vmatprep.mubr.bf16.mxu0 0
  %723 = vmatmul.mubr.bf16.gmra.mxu0 %v633
  %v724 = vpop.f32.mrf.mxu0
  %v725 = vadd.f32 %v612, %v724
  %v726 = vpop.f32.mrf.mxu0
  %v727 = vpop.f32.mrf.mxu0
  %v728 = vadd.f32 %v612, %v727
  %v729 = vpop.f32.mrf.mxu0
  %730 = vmatprep.mubr.bf16.mxu0 0
  %731 = vmatmul.mubr.bf16.gmra.mxu0 %v636
  %v732 = vpop.f32.mrf.mxu0
  %v733 = vadd.f32 %v612, %v732
  %v734 = vpop.f32.mrf.mxu0
  %v735 = vpop.f32.mrf.mxu0
  %v736 = vadd.f32 %v612, %v735
  %v737 = vpop.f32.mrf.mxu0
  %738 = vmatprep.mubr.bf16.mxu0 0
  %739 = vmatmul.mubr.bf16.gmra.mxu0 %v639
  %v740 = vpop.f32.mrf.mxu0
  %v741 = vadd.f32 %v612, %v740
  %v742 = vpop.f32.mrf.mxu0
  %v743 = vpop.f32.mrf.mxu0
  %v744 = vadd.f32 %v612, %v743
  %v745 = vpop.f32.mrf.mxu0
  %746 = vmatprep.mubr.bf16.mxu0 0
  %747 = vmatmul.mubr.bf16.gmra.mxu0 %v642
  %v748 = vpop.f32.mrf.mxu0
  %v749 = vadd.f32 %v612, %v748
  %v750 = vpop.f32.mrf.mxu0
  %v751 = vpop.f32.mrf.mxu0
  %v752 = vadd.f32 %v612, %v751
  %v753 = vpop.f32.mrf.mxu0
  %754 = vmatprep.mubr.bf16.mxu0 0
  %755 = vmatmul.mubr.bf16.gmra.mxu0 %v645
  %v756 = vpop.f32.mrf.mxu0
  %v757 = vadd.f32 %v612, %v756
  %v758 = vpop.f32.mrf.mxu0
  %v759 = vpop.f32.mrf.mxu0
  %v760 = vadd.f32 %v612, %v759
  %v761 = vpop.f32.mrf.mxu0
  %762 = vmatprep.mubr.bf16.mxu0 0
  %763 = vmatmul.mubr.bf16.gmra.mxu0 %v648
  %v764 = vpop.f32.mrf.mxu0
  %v765 = vadd.f32 %v612, %v764
  %v766 = vpop.f32.mrf.mxu0
  %v767 = vpop.f32.mrf.mxu0
  %v768 = vadd.f32 %v612, %v767
  %v769 = vpop.f32.mrf.mxu0
  %770 = vmatprep.mubr.bf16.mxu0 0
  %771 = vmatmul.mubr.bf16.gmra.mxu0 %v651
  %v772 = vpop.f32.mrf.mxu0
  %v773 = vadd.f32 %v612, %v772
  %v774 = vpop.f32.mrf.mxu0
  %v775 = vpop.f32.mrf.mxu0
  %v776 = vadd.f32 %v612, %v775
  %v777 = vpop.f32.mrf.mxu0
  %778 = vmatprep.mubr.bf16.mxu0 0
  %779 = vmatmul.mubr.bf16.gmra.mxu0 %v654
  %v780 = vpop.f32.mrf.mxu0
  %v781 = vadd.f32 %v612, %v780
  %v782 = vpop.f32.mrf.mxu0
  %v783 = vpop.f32.mrf.mxu0
  %v784 = vadd.f32 %v612, %v783
  %v785 = vpop.f32.mrf.mxu0
  %786 = vmatprep.mubr.bf16.mxu0 0
  %787 = vmatmul.mubr.bf16.gmra.mxu0 %v657
  %v788 = vpop.f32.mrf.mxu0
  %v789 = vadd.f32 %v612, %v788
  %v790 = vpop.f32.mrf.mxu0
  %v791 = vpop.f32.mrf.mxu0
  %v792 = vadd.f32 %v612, %v791
  %v793 = vpop.f32.mrf.mxu0
  %794 = vmatprep.mubr.bf16.mxu0 0
  %795 = vmatmul.mubr.bf16.gmra.mxu0 %v660
  %v796 = vpop.f32.mrf.mxu0
  %v797 = vadd.f32 %v612, %v796
  %v798 = vpop.f32.mrf.mxu0
  %v799 = vpop.f32.mrf.mxu0
  %v800 = vadd.f32 %v612, %v799
  %v801 = vpop.f32.mrf.mxu0
  %802 = vmatprep.mubr.bf16.mxu0 0
  %803 = vmatmul.mubr.bf16.gmra.mxu0 %v663
  %v804 = vpop.f32.mrf.mxu0
  %v805 = vadd.f32 %v612, %v804
  %v806 = vpop.f32.mrf.mxu0
  %v807 = vpop.f32.mrf.mxu0
  %v808 = vadd.f32 %v612, %v807
  %v809 = vpop.f32.mrf.mxu0
  %810 = vmatprep.mubr.bf16.mxu0 0
  %811 = vmatmul.mubr.bf16.gmra.mxu0 %v666
  %v812 = vpop.f32.mrf.mxu0
  %v813 = vadd.f32 %v612, %v812
  %v814 = vpop.f32.mrf.mxu0
  %v815 = vpop.f32.mrf.mxu0
  %v816 = vadd.f32 %v612, %v815
  %v817 = vpop.f32.mrf.mxu0
  %818 = vmatprep.mubr.bf16.mxu0 0
  %819 = vmatmul.mubr.bf16.gmra.mxu0 %v669
  %v820 = vpop.f32.mrf.mxu0
  %v821 = vadd.f32 %v612, %v820
  %v822 = vpop.f32.mrf.mxu0
  %v823 = vpop.f32.mrf.mxu0
  %v824 = vadd.f32 %v612, %v823
  %v825 = vpop.f32.mrf.mxu0
  %826 = vmatprep.mubr.bf16.mxu0 0
  %827 = vmatmul.mubr.bf16.gmra.mxu0 %v672
  %v828 = vpop.f32.mrf.mxu0
  %v829 = vadd.f32 %v612, %v828
  %v830 = vpop.f32.mrf.mxu0
  %v831 = vpop.f32.mrf.mxu0
  %v832 = vadd.f32 %v612, %v831
  %v833 = vpop.f32.mrf.mxu0
  %834 = vdwg.mxu0
  %v835 = vmul.f32 %v709, 0.5
  %v836 = vmul.f32 %v712, 0.5
  %v837 = vmul.f32 %v717, 0.5
  %v838 = vmul.f32 %v720, 0.5
  %v839 = vmul.f32 %v725, 0.5
  %v840 = vmul.f32 %v728, 0.5
  %v841 = vmul.f32 %v733, 0.5
  %v842 = vmul.f32 %v736, 0.5
  %v843 = vmul.f32 %v741, 0.5
  %v844 = vmul.f32 %v744, 0.5
  %v845 = vmul.f32 %v749, 0.5
  %v846 = vmul.f32 %v752, 0.5
  %v847 = vmul.f32 %v757, 0.5
  %v848 = vmul.f32 %v760, 0.5
  %v849 = vmul.f32 %v765, 0.5
  %v850 = vmul.f32 %v768, 0.5
  %v851 = vmul.f32 %v773, 0.5
  %v852 = vmul.f32 %v776, 0.5
  %v853 = vmul.f32 %v781, 0.5
  %v854 = vmul.f32 %v784, 0.5
  %v855 = vmul.f32 %v789, 0.5
  %v856 = vmul.f32 %v792, 0.5
  %v857 = vmul.f32 %v797, 0.5
  %v858 = vmul.f32 %v800, 0.5
  %v859 = vmul.f32 %v805, 0.5
  %v860 = vmul.f32 %v808, 0.5
  %v861 = vmul.f32 %v813, 0.5
  %v862 = vmul.f32 %v816, 0.5
  %v863 = vmul.f32 %v821, 0.5
  %v864 = vmul.f32 %v824, 0.5
  %v865 = vmul.f32 %v829, 0.5
  %v866 = vmul.f32 %v832, 0.5
  %v867 = vmul.f32 %v709, 0.70710677
  %v868 = vmul.f32 %v712, 0.70710677
  %v869 = vmul.f32 %v717, 0.70710677
  %v870 = vmul.f32 %v720, 0.70710677
  %v871 = vmul.f32 %v725, 0.70710677
  %v872 = vmul.f32 %v728, 0.70710677
  %v873 = vmul.f32 %v733, 0.70710677
  %v874 = vmul.f32 %v736, 0.70710677
  %v875 = vmul.f32 %v741, 0.70710677
  %v876 = vmul.f32 %v744, 0.70710677
  %v877 = vmul.f32 %v749, 0.70710677
  %v878 = vmul.f32 %v752, 0.70710677
  %v879 = vmul.f32 %v757, 0.70710677
  %v880 = vmul.f32 %v760, 0.70710677
  %v881 = vmul.f32 %v765, 0.70710677
  %v882 = vmul.f32 %v768, 0.70710677
  %v883 = vmul.f32 %v773, 0.70710677
  %v884 = vmul.f32 %v776, 0.70710677
  %v885 = vmul.f32 %v781, 0.70710677
  %v886 = vmul.f32 %v784, 0.70710677
  %v887 = vmul.f32 %v789, 0.70710677
  %v888 = vmul.f32 %v792, 0.70710677
  %v889 = vmul.f32 %v797, 0.70710677
  %v890 = vmul.f32 %v800, 0.70710677
  %v891 = vmul.f32 %v805, 0.70710677
  %v892 = vmul.f32 %v808, 0.70710677
  %v893 = vmul.f32 %v813, 0.70710677
  %v894 = vmul.f32 %v816, 0.70710677
  %v895 = vmul.f32 %v821, 0.70710677
  %v896 = vmul.f32 %v824, 0.70710677
  %v897 = vmul.f32 %v829, 0.70710677
  %v898 = vmul.f32 %v832, 0.70710677
  %v899 = verf.f32.pop %v867
  %v900 = verf.f32.pop %v868
  %v901 = verf.f32.pop %v869
  %v902 = verf.f32.pop %v870
  %v903 = verf.f32.pop %v871
  %v904 = verf.f32.pop %v872
  %v905 = verf.f32.pop %v873
  %v906 = verf.f32.pop %v874
  %v907 = verf.f32.pop %v875
  %v908 = verf.f32.pop %v876
  %v909 = verf.f32.pop %v877
  %v910 = verf.f32.pop %v878
  %v911 = verf.f32.pop %v879
  %v912 = verf.f32.pop %v880
  %v913 = verf.f32.pop %v881
  %v914 = verf.f32.pop %v882
  %v915 = verf.f32.pop %v883
  %v916 = verf.f32.pop %v884
  %v917 = verf.f32.pop %v885
  %v918 = verf.f32.pop %v886
  %v919 = verf.f32.pop %v887
  %v920 = verf.f32.pop %v888
  %v921 = verf.f32.pop %v889
  %v922 = verf.f32.pop %v890
  %v923 = verf.f32.pop %v891
  %v924 = verf.f32.pop %v892
  %v925 = verf.f32.pop %v893
  %v926 = verf.f32.pop %v894
  %v927 = verf.f32.pop %v895
  %v928 = verf.f32.pop %v896
  %v929 = verf.f32.pop %v897
  %v930 = verf.f32.pop %v898
  %v931 = vadd.f32 %v899, 1.0
  %v932 = vadd.f32 %v900, 1.0
  %v933 = vadd.f32 %v901, 1.0
  %v934 = vadd.f32 %v902, 1.0
  %v935 = vadd.f32 %v903, 1.0
  %v936 = vadd.f32 %v904, 1.0
  %v937 = vadd.f32 %v905, 1.0
  %v938 = vadd.f32 %v906, 1.0
  %v939 = vadd.f32 %v907, 1.0
  %v940 = vadd.f32 %v908, 1.0
  %v941 = vadd.f32 %v909, 1.0
  %v942 = vadd.f32 %v910, 1.0
  %v943 = vadd.f32 %v911, 1.0
  %v944 = vadd.f32 %v912, 1.0
  %v945 = vadd.f32 %v913, 1.0
  %v946 = vadd.f32 %v914, 1.0
  %v947 = vadd.f32 %v915, 1.0
  %v948 = vadd.f32 %v916, 1.0
  %v949 = vadd.f32 %v917, 1.0
  %v950 = vadd.f32 %v918, 1.0
  %v951 = vadd.f32 %v919, 1.0
  %v952 = vadd.f32 %v920, 1.0
  %v953 = vadd.f32 %v921, 1.0
  %v954 = vadd.f32 %v922, 1.0
  %v955 = vadd.f32 %v923, 1.0
  %v956 = vadd.f32 %v924, 1.0
  %v957 = vadd.f32 %v925, 1.0
  %v958 = vadd.f32 %v926, 1.0
  %v959 = vadd.f32 %v927, 1.0
  %v960 = vadd.f32 %v928, 1.0
  %v961 = vadd.f32 %v929, 1.0
  %v962 = vadd.f32 %v930, 1.0
  %v963 = vmul.f32 %v835, %v931
  %v964 = vmul.f32 %v836, %v932
  %v965 = vmul.f32 %v837, %v933
  %v966 = vmul.f32 %v838, %v934
  %v967 = vmul.f32 %v839, %v935
  %v968 = vmul.f32 %v840, %v936
  %v969 = vmul.f32 %v841, %v937
  %v970 = vmul.f32 %v842, %v938
  %v971 = vmul.f32 %v843, %v939
  %v972 = vmul.f32 %v844, %v940
  %v973 = vmul.f32 %v845, %v941
  %v974 = vmul.f32 %v846, %v942
  %v975 = vmul.f32 %v847, %v943
  %v976 = vmul.f32 %v848, %v944
  %v977 = vmul.f32 %v849, %v945
  %v978 = vmul.f32 %v850, %v946
  %v979 = vmul.f32 %v851, %v947
  %v980 = vmul.f32 %v852, %v948
  %v981 = vmul.f32 %v853, %v949
  %v982 = vmul.f32 %v854, %v950
  %v983 = vmul.f32 %v855, %v951
  %v984 = vmul.f32 %v856, %v952
  %v985 = vmul.f32 %v857, %v953
  %v986 = vmul.f32 %v858, %v954
  %v987 = vmul.f32 %v859, %v955
  %v988 = vmul.f32 %v860, %v956
  %v989 = vmul.f32 %v861, %v957
  %v990 = vmul.f32 %v862, %v958
  %v991 = vmul.f32 %v863, %v959
  %v992 = vmul.f32 %v864, %v960
  %v993 = vmul.f32 %v865, %v961
  %v994 = vmul.f32 %v866, %v962
  %v995 = vpack.c.bf16 %v964, %v963
  %v996 = vpack.c.bf16 %v966, %v965
  %v997 = vpack.c.bf16 %v968, %v967
  %v998 = vpack.c.bf16 %v970, %v969
  %v999 = vpack.c.bf16 %v972, %v971
  %v1000 = vpack.c.bf16 %v974, %v973
  %v1001 = vpack.c.bf16 %v976, %v975
  %v1002 = vpack.c.bf16 %v978, %v977
  %v1003 = vpack.c.bf16 %v980, %v979
  %v1004 = vpack.c.bf16 %v982, %v981
  %v1005 = vpack.c.bf16 %v984, %v983
  %v1006 = vpack.c.bf16 %v986, %v985
  %v1007 = vpack.c.bf16 %v988, %v987
  %v1008 = vpack.c.bf16 %v990, %v989
  %v1009 = vpack.c.bf16 %v992, %v991
  %v1010 = vpack.c.bf16 %v994, %v993
  %v1011 = vld [vmem:[%s5] sm:$0xf]
  %v1012 = vld [vmem:[%s5 + $0x4] sm:$0xf]
  %v1013 = vld [vmem:[%s5 + $0x8] sm:$0xf]
  %v1014 = vld [vmem:[%s5 + $0xc] sm:$0xf]
  %v1015 = vld [vmem:[%s5 + $0x10] sm:$0xf]
  %v1016 = vld [vmem:[%s5 + $0x14] sm:$0xf]
  %v1017 = vld [vmem:[%s5 + $0x18] sm:$0xf]
  %v1018 = vld [vmem:[%s5 + $0x1c] sm:$0xf]
  %v1019 = vld [vmem:[%s6] sm:$0x1]
  %v1021 = vlaneseq
  %v1022 = vshrl.u32 %v1021, 7
  %v1023 = vsub.s32 0, %v1022
  %v1024 = vrot.slane %v1019, %v1023
  %v1034 = vunpack.c.l.b16 %v1011
  %v1035 = vunpack.c.l.b16 %v1012
  %v1036 = vunpack.c.l.b16 %v1013
  %v1037 = vunpack.c.l.b16 %v1014
  %v1038 = vunpack.c.l.b16 %v1015
  %v1039 = vunpack.c.l.b16 %v1016
  %v1040 = vunpack.c.l.b16 %v1017
  %v1041 = vunpack.c.l.b16 %v1018
  %v1042 = vpack.c.b16 %v1035, %v1034
  %v1043 = vpack.c.b16 %v1037, %v1036
  %v1044 = vpack.c.b16 %v1039, %v1038
  %v1045 = vpack.c.b16 %v1041, %v1040
  %vm1050 = vcmask 523264
  %v1052 = vsel %vm1050, %v995, 0
  %v1055 = vsel %vm1050, %v996, 0
  %v1058 = vsel %vm1050, %v997, 0
  %v1061 = vsel %vm1050, %v998, 0
  %v1064 = vsel %vm1050, %v999, 0
  %v1067 = vsel %vm1050, %v1000, 0
  %v1070 = vsel %vm1050, %v1001, 0
  %v1073 = vsel %vm1050, %v1002, 0
  %v1076 = vsel %vm1050, %v1003, 0
  %v1079 = vsel %vm1050, %v1004, 0
  %v1082 = vsel %vm1050, %v1005, 0
  %v1085 = vsel %vm1050, %v1006, 0
  %v1088 = vsel %vm1050, %v1007, 0
  %v1091 = vsel %vm1050, %v1008, 0
  %v1094 = vsel %vm1050, %v1009, 0
  %v1097 = vsel %vm1050, %v1010, 0
  %1099 = vmatprep.subr.bf16.mxu0 0
  %1100 = vmatpush1.bf16.msra.mxu0 0
  %1101 = vmatprep.subr.bf16.mxu0 0
  %1102 = vmatpush1.bf16.msra.mxu0 0
  %1103 = vmatprep.subr.bf16.mxu0 0
  %1104 = vmatpush1.bf16.msra.mxu0 0
  %1105 = vmatprep.subr.bf16.mxu0 0
  %1106 = vmatpush1.bf16.msra.mxu0 0
  %1107 = vmatprep.subr.bf16.mxu0 0
  %1108 = vmatpush1.bf16.msra.mxu0 %v1045
  %1109 = vmatprep.subr.bf16.mxu0 0
  %1110 = vmatpush1.bf16.msra.mxu0 %v1044
  %1111 = vmatprep.subr.bf16.mxu0 0
  %1112 = vmatpush1.bf16.msra.mxu0 %v1043
  %1113 = vmatprep.subr.bf16.mxu0 0
  %1114 = vmatpush1.bf16.msra.mxu0 %v1042
  %1115 = vmatprep.subr.bf16.mxu0 0
  %1116 = vmatpush2.bf16.msra.mxu0 0
  %1117 = vmatprep.subr.bf16.mxu0 0
  %1118 = vmatpush2.bf16.msra.mxu0 0
  %1119 = vmatprep.subr.bf16.mxu0 0
  %1120 = vmatpush2.bf16.msra.mxu0 0
  %1121 = vmatprep.subr.bf16.mxu0 0
  %1122 = vmatpush2.bf16.msra.mxu0 0
  %1123 = vmatprep.subr.bf16.mxu0 0
  %1124 = vmatpush2.bf16.msra.mxu0 0
  %1125 = vmatprep.subr.bf16.mxu0 0
  %1126 = vmatpush2.bf16.msra.mxu0 0
  %1127 = vmatprep.subr.bf16.mxu0 0
  %1128 = vmatpush2.bf16.msra.mxu0 0
  %1129 = vmatprep.subr.bf16.mxu0 0
  %1130 = vmatpush2.bf16.msra.mxu0 0
  %1131 = vmatprep.mubr.bf16.mxu0 0
  %1132 = vmatmul.mubr.bf16.gmra.mxu0 %v1052
  %v1133 = vpop.f32.mrf.mxu0
  %v1134 = vadd.f32 %v1024, %v1133
  %v1135 = vpop.f32.mrf.mxu0
  %v1136 = vpop.f32.mrf.mxu0
  %v1137 = vadd.f32 %v1024, %v1136
  %v1138 = vpop.f32.mrf.mxu0
  %1139 = vmatprep.mubr.bf16.mxu0 0
  %1140 = vmatmul.mubr.bf16.gmra.mxu0 %v1055
  %v1141 = vpop.f32.mrf.mxu0
  %v1142 = vadd.f32 %v1024, %v1141
  %v1143 = vpop.f32.mrf.mxu0
  %v1144 = vpop.f32.mrf.mxu0
  %v1145 = vadd.f32 %v1024, %v1144
  %v1146 = vpop.f32.mrf.mxu0
  %1147 = vmatprep.mubr.bf16.mxu0 0
  %1148 = vmatmul.mubr.bf16.gmra.mxu0 %v1058
  %v1149 = vpop.f32.mrf.mxu0
  %v1150 = vadd.f32 %v1024, %v1149
  %v1151 = vpop.f32.mrf.mxu0
  %v1152 = vpop.f32.mrf.mxu0
  %v1153 = vadd.f32 %v1024, %v1152
  %v1154 = vpop.f32.mrf.mxu0
  %1155 = vmatprep.mubr.bf16.mxu0 0
  %1156 = vmatmul.mubr.bf16.gmra.mxu0 %v1061
  %v1157 = vpop.f32.mrf.mxu0
  %v1158 = vadd.f32 %v1024, %v1157
  %v1159 = vpop.f32.mrf.mxu0
  %v1160 = vpop.f32.mrf.mxu0
  %v1161 = vadd.f32 %v1024, %v1160
  %v1162 = vpop.f32.mrf.mxu0
  %1163 = vmatprep.mubr.bf16.mxu0 0
  %1164 = vmatmul.mubr.bf16.gmra.mxu0 %v1064
  %v1165 = vpop.f32.mrf.mxu0
  %v1166 = vadd.f32 %v1024, %v1165
  %v1167 = vpop.f32.mrf.mxu0
  %v1168 = vpop.f32.mrf.mxu0
  %v1169 = vadd.f32 %v1024, %v1168
  %v1170 = vpop.f32.mrf.mxu0
  %1171 = vmatprep.mubr.bf16.mxu0 0
  %1172 = vmatmul.mubr.bf16.gmra.mxu0 %v1067
  %v1173 = vpop.f32.mrf.mxu0
  %v1174 = vadd.f32 %v1024, %v1173
  %v1175 = vpop.f32.mrf.mxu0
  %v1176 = vpop.f32.mrf.mxu0
  %v1177 = vadd.f32 %v1024, %v1176
  %v1178 = vpop.f32.mrf.mxu0
  %1179 = vmatprep.mubr.bf16.mxu0 0
  %1180 = vmatmul.mubr.bf16.gmra.mxu0 %v1070
  %v1181 = vpop.f32.mrf.mxu0
  %v1182 = vadd.f32 %v1024, %v1181
  %v1183 = vpop.f32.mrf.mxu0
  %v1184 = vpop.f32.mrf.mxu0
  %v1185 = vadd.f32 %v1024, %v1184
  %v1186 = vpop.f32.mrf.mxu0
  %1187 = vmatprep.mubr.bf16.mxu0 0
  %1188 = vmatmul.mubr.bf16.gmra.mxu0 %v1073
  %v1189 = vpop.f32.mrf.mxu0
  %v1190 = vadd.f32 %v1024, %v1189
  %v1191 = vpop.f32.mrf.mxu0
  %v1192 = vpop.f32.mrf.mxu0
  %v1193 = vadd.f32 %v1024, %v1192
  %v1194 = vpop.f32.mrf.mxu0
  %1195 = vmatprep.mubr.bf16.mxu0 0
  %1196 = vmatmul.mubr.bf16.gmra.mxu0 %v1076
  %v1197 = vpop.f32.mrf.mxu0
  %v1198 = vadd.f32 %v1024, %v1197
  %v1199 = vpop.f32.mrf.mxu0
  %v1200 = vpop.f32.mrf.mxu0
  %v1201 = vadd.f32 %v1024, %v1200
  %v1202 = vpop.f32.mrf.mxu0
  %1203 = vmatprep.mubr.bf16.mxu0 0
  %1204 = vmatmul.mubr.bf16.gmra.mxu0 %v1079
  %v1205 = vpop.f32.mrf.mxu0
  %v1206 = vadd.f32 %v1024, %v1205
  %v1207 = vpop.f32.mrf.mxu0
  %v1208 = vpop.f32.mrf.mxu0
  %v1209 = vadd.f32 %v1024, %v1208
  %v1210 = vpop.f32.mrf.mxu0
  %1211 = vmatprep.mubr.bf16.mxu0 0
  %1212 = vmatmul.mubr.bf16.gmra.mxu0 %v1082
  %v1213 = vpop.f32.mrf.mxu0
  %v1214 = vadd.f32 %v1024, %v1213
  %v1215 = vpop.f32.mrf.mxu0
  %v1216 = vpop.f32.mrf.mxu0
  %v1217 = vadd.f32 %v1024, %v1216
  %v1218 = vpop.f32.mrf.mxu0
  %1219 = vmatprep.mubr.bf16.mxu0 0
  %1220 = vmatmul.mubr.bf16.gmra.mxu0 %v1085
  %v1221 = vpop.f32.mrf.mxu0
  %v1222 = vadd.f32 %v1024, %v1221
  %v1223 = vpop.f32.mrf.mxu0
  %v1224 = vpop.f32.mrf.mxu0
  %v1225 = vadd.f32 %v1024, %v1224
  %v1226 = vpop.f32.mrf.mxu0
  %1227 = vmatprep.mubr.bf16.mxu0 0
  %1228 = vmatmul.mubr.bf16.gmra.mxu0 %v1088
  %v1229 = vpop.f32.mrf.mxu0
  %v1230 = vadd.f32 %v1024, %v1229
  %v1231 = vpop.f32.mrf.mxu0
  %v1232 = vpop.f32.mrf.mxu0
  %v1233 = vadd.f32 %v1024, %v1232
  %v1234 = vpop.f32.mrf.mxu0
  %1235 = vmatprep.mubr.bf16.mxu0 0
  %1236 = vmatmul.mubr.bf16.gmra.mxu0 %v1091
  %v1237 = vpop.f32.mrf.mxu0
  %v1238 = vadd.f32 %v1024, %v1237
  %v1239 = vpop.f32.mrf.mxu0
  %v1240 = vpop.f32.mrf.mxu0
  %v1241 = vadd.f32 %v1024, %v1240
  %v1242 = vpop.f32.mrf.mxu0
  %1243 = vmatprep.mubr.bf16.mxu0 0
  %1244 = vmatmul.mubr.bf16.gmra.mxu0 %v1094
  %v1245 = vpop.f32.mrf.mxu0
  %v1246 = vadd.f32 %v1024, %v1245
  %v1247 = vpop.f32.mrf.mxu0
  %v1248 = vpop.f32.mrf.mxu0
  %v1249 = vadd.f32 %v1024, %v1248
  %v1250 = vpop.f32.mrf.mxu0
  %1251 = vmatprep.mubr.bf16.mxu0 0
  %1252 = vmatmul.mubr.bf16.gmra.mxu0 %v1097
  %v1253 = vpop.f32.mrf.mxu0
  %v1254 = vadd.f32 %v1024, %v1253
  %v1255 = vpop.f32.mrf.mxu0
  %v1256 = vpop.f32.mrf.mxu0
  %v1257 = vadd.f32 %v1024, %v1256
  %v1258 = vpop.f32.mrf.mxu0
  %1259 = vdwg.mxu0
  %1260 = vst.msk [vmem:[%s7] sm:$0xff] %vm91, %v1134
  %1261 = vst.msk [vmem:[%s7 + $0x8] sm:$0xff] %vm91, %v1137
  %1262 = vst.msk [vmem:[%s7 + $0x10] sm:$0xff] %vm91, %v1142
  %1263 = vst.msk [vmem:[%s7 + $0x18] sm:$0xff] %vm91, %v1145
  %1264 = vst.msk [vmem:[%s7 + $0x20] sm:$0xff] %vm91, %v1150
  %1265 = vst.msk [vmem:[%s7 + $0x28] sm:$0xff] %vm91, %v1153
  %1266 = vst.msk [vmem:[%s7 + $0x30] sm:$0xff] %vm91, %v1158
  %1267 = vst.msk [vmem:[%s7 + $0x38] sm:$0xff] %vm91, %v1161
  %1268 = vst.msk [vmem:[%s7 + $0x40] sm:$0xff] %vm91, %v1166
  %1269 = vst.msk [vmem:[%s7 + $0x48] sm:$0xff] %vm91, %v1169
  %1270 = vst.msk [vmem:[%s7 + $0x50] sm:$0xff] %vm91, %v1174
  %1271 = vst.msk [vmem:[%s7 + $0x58] sm:$0xff] %vm91, %v1177
  %1272 = vst.msk [vmem:[%s7 + $0x60] sm:$0xff] %vm91, %v1182
  %1273 = vst.msk [vmem:[%s7 + $0x68] sm:$0xff] %vm91, %v1185
  %1274 = vst.msk [vmem:[%s7 + $0x70] sm:$0xff] %vm91, %v1190
  %1275 = vst.msk [vmem:[%s7 + $0x78] sm:$0xff] %vm91, %v1193
  %1276 = vst.msk [vmem:[%s7 + $0x80] sm:$0xff] %vm91, %v1198
  %1277 = vst.msk [vmem:[%s7 + $0x88] sm:$0xff] %vm91, %v1201
  %1278 = vst.msk [vmem:[%s7 + $0x90] sm:$0xff] %vm91, %v1206
  %1279 = vst.msk [vmem:[%s7 + $0x98] sm:$0xff] %vm91, %v1209
  %1280 = vst.msk [vmem:[%s7 + $0xa0] sm:$0xff] %vm91, %v1214
  %1281 = vst.msk [vmem:[%s7 + $0xa8] sm:$0xff] %vm91, %v1217
  %1282 = vst.msk [vmem:[%s7 + $0xb0] sm:$0xff] %vm91, %v1222
  %1283 = vst.msk [vmem:[%s7 + $0xb8] sm:$0xff] %vm91, %v1225
  %1284 = vst.msk [vmem:[%s7 + $0xc0] sm:$0xff] %vm91, %v1230
  %1285 = vst.msk [vmem:[%s7 + $0xc8] sm:$0xff] %vm91, %v1233
  %1286 = vst.msk [vmem:[%s7 + $0xd0] sm:$0xff] %vm91, %v1238
  %1287 = vst.msk [vmem:[%s7 + $0xd8] sm:$0xff] %vm91, %v1241
  %1288 = vst.msk [vmem:[%s7 + $0xe0] sm:$0xff] %vm91, %v1246
  %1289 = vst.msk [vmem:[%s7 + $0xe8] sm:$0xff] %vm91, %v1249
  %1290 = vst.msk [vmem:[%s7 + $0xf0] sm:$0xff] %vm91, %v1254
  %1291 = vst.msk [vmem:[%s7 + $0xf8] sm:$0xff] %vm91, %v1257
  // Predicated region
  $region30: #{tpu_custom_call.1} parent=0 // pred_check
    _
  $region31: #{tpu_custom_call.1} parent=0 // pred_check_branch
    %1293 = sbr.rel (0) target = $region33
  $region32: #{tpu_custom_call.1} parent=0 // pred_region
    _
  $region33: #{tpu_custom_call.1} parent=0 // pred_fallthru
    _
  // Predicated region
  $region34: #{tpu_custom_call.1} parent=0 // pred_check
    _
  $region35: #{tpu_custom_call.1} parent=0 // pred_check_branch
    %1295 = sbr.rel (0) target = $region37
  $region36: #{tpu_custom_call.1} parent=0 // pred_region
    _
  $region37: #{tpu_custom_call.1} parent=0 // pred_fallthru
    _

// kernel: tpu_custom_call.1
$region0: #{tpu_custom_call.1}
  #allocation0 [shape = 'u32[]', space=smem, size = 0x4, offset = 0x4, fixed_abs, tag = 'smem constant byte address 0x4 - core index']
  #allocation1 [shape = 'u32[144,128]{1,0:T(1,128)}', space=vmem, size = 0x12000, scoped, tag = 'internal scratch']
  %s0 = inlined_call_operand.vmem [shape: bf16[256,32], index: 0, kind: input, shape index: {}]
  %s1 = inlined_call_operand.vmem [shape: f32[1,32], index: 1, kind: input, shape index: {}]
  %s2 = inlined_call_operand.vmem [shape: f32[1,32], index: 2, kind: input, shape index: {}]
  %s3 = inlined_call_operand.vmem [shape: bf16[32,64], index: 3, kind: input, shape index: {}]
  %s4 = inlined_call_operand.vmem [shape: f32[1,64], index: 4, kind: input, shape index: {}]
  %s5 = inlined_call_operand.vmem [shape: bf16[64,32], index: 5, kind: input, shape index: {}]
  %s6 = inlined_call_operand.vmem [shape: f32[1,32], index: 6, kind: input, shape index: {}]
  %s7 = inlined_call_operand.vmem [shape: f32[256,32], index: 7, kind: output, shape index: {}]
  %s8 = sld [smem:[#allocation0]]
  $region38: #{tpu_custom_call.1} parent=0
    _
  %s10 = ssub.s32 1, %s8
  %s11 = scalar_select 0, %s10, %s8
  // Predicated region
  $region2: #{tpu_custom_call.1} parent=0 // pred_check
    _
  $region3: #{tpu_custom_call.1} parent=0 // pred_check_branch
    %13 = sbr.rel (0) target = $region5
  $region4: #{tpu_custom_call.1} parent=0 // pred_region
    _
  $region5: #{tpu_custom_call.1} parent=0 // pred_fallthru
    _
  // Predicated region
  $region6: #{tpu_custom_call.1} parent=0 // pred_check
    _
  $region7: #{tpu_custom_call.1} parent=0 // pred_check_branch
    %15 = sbr.rel (0) target = $region9
  $region8: #{tpu_custom_call.1} parent=0 // pred_region
    _
  $region9: #{tpu_custom_call.1} parent=0 // pred_fallthru
    _
  // Predicated region
  $region10: #{tpu_custom_call.1} parent=0 // pred_check
    _
  $region11: #{tpu_custom_call.1} parent=0 // pred_check_branch
    %17 = sbr.rel (0) target = $region13
  $region12: #{tpu_custom_call.1} parent=0 // pred_region
    _
  $region13: #{tpu_custom_call.1} parent=0 // pred_fallthru
    _
  // Predicated region
  $region14: #{tpu_custom_call.1} parent=0 // pred_check
    _
  $region15: #{tpu_custom_call.1} parent=0 // pred_check_branch
    %19 = sbr.rel (0) target = $region17
  $region16: #{tpu_custom_call.1} parent=0 // pred_region
    _
  $region17: #{tpu_custom_call.1} parent=0 // pred_fallthru
    _
  // Predicated region
  $region18: #{tpu_custom_call.1} parent=0 // pred_check
    _
  $region19: #{tpu_custom_call.1} parent=0 // pred_check_branch
    %21 = sbr.rel (0) target = $region21
  $region20: #{tpu_custom_call.1} parent=0 // pred_region
    _
  $region21: #{tpu_custom_call.1} parent=0 // pred_fallthru
    _
  // Predicated region
  $region22: #{tpu_custom_call.1} parent=0 // pred_check
    _
  $region23: #{tpu_custom_call.1} parent=0 // pred_check_branch
    %23 = sbr.rel (0) target = $region25
  $region24: #{tpu_custom_call.1} parent=0 // pred_region
    _
  $region25: #{tpu_custom_call.1} parent=0 // pred_fallthru
    _
  // Predicated region
  $region26: #{tpu_custom_call.1} parent=0 // pred_check
    _
  $region27: #{tpu_custom_call.1} parent=0 // pred_check_branch
    %25 = sbr.rel (0) target = $region29
  $region28: #{tpu_custom_call.1} parent=0 // pred_region
    _
  $region29: #{tpu_custom_call.1} parent=0 // pred_fallthru
    _
  %v27 = vld [vmem:[%s0] sm:$0xf]
  %v28 = vld [vmem:[%s0 + $0x4] sm:$0xf]
  %v29 = vld [vmem:[%s0 + $0x8] sm:$0xf]
  %v30 = vld [vmem:[%s0 + $0xc] sm:$0xf]
  %v31 = vld [vmem:[%s0 + $0x10] sm:$0xf]
  %v32 = vld [vmem:[%s0 + $0x14] sm:$0xf]
  %v33 = vld [vmem:[%s0 + $0x18] sm:$0xf]
  %v34 = vld [vmem:[%s0 + $0x1c] sm:$0xf]
  %v35 = vld [vmem:[%s0 + $0x20] sm:$0xf]
  %v36 = vld [vmem:[%s0 + $0x24] sm:$0xf]
  %v37 = vld [vmem:[%s0 + $0x28] sm:$0xf]
  %v38 = vld [vmem:[%s0 + $0x2c] sm:$0xf]
  %v39 = vld [vmem:[%s0 + $0x30] sm:$0xf]
  %v40 = vld [vmem:[%s0 + $0x34] sm:$0xf]
  %v41 = vld [vmem:[%s0 + $0x38] sm:$0xf]
  %v42 = vld [vmem:[%s0 + $0x3c] sm:$0xf]
  %v43 = vld [vmem:[%s0 + $0x40] sm:$0xf]
  %v44 = vld [vmem:[%s0 + $0x44] sm:$0xf]
  %v45 = vld [vmem:[%s0 + $0x48] sm:$0xf]
  %v46 = vld [vmem:[%s0 + $0x4c] sm:$0xf]
  %v47 = vld [vmem:[%s0 + $0x50] sm:$0xf]
  %v48 = vld [vmem:[%s0 + $0x54] sm:$0xf]
  %v49 = vld [vmem:[%s0 + $0x58] sm:$0xf]
  %v50 = vld [vmem:[%s0 + $0x5c] sm:$0xf]
  %v51 = vld [vmem:[%s0 + $0x60] sm:$0xf]
  %v52 = vld [vmem:[%s0 + $0x64] sm:$0xf]
  %v53 = vld [vmem:[%s0 + $0x68] sm:$0xf]
  %v54 = vld [vmem:[%s0 + $0x6c] sm:$0xf]
  %v55 = vld [vmem:[%s0 + $0x70] sm:$0xf]
  %v56 = vld [vmem:[%s0 + $0x74] sm:$0xf]
  %v57 = vld [vmem:[%s0 + $0x78] sm:$0xf]
  %v58 = vld [vmem:[%s0 + $0x7c] sm:$0xf]
  %v59 = vunpack.c.l.bf16 %v27
  %v60 = vunpack.c.l.bf16 %v28
  %v61 = vunpack.c.l.bf16 %v29
  %v62 = vunpack.c.l.bf16 %v30
  %v63 = vunpack.c.l.bf16 %v31
  %v64 = vunpack.c.l.bf16 %v32
  %v65 = vunpack.c.l.bf16 %v33
  %v66 = vunpack.c.l.bf16 %v34
  %v67 = vunpack.c.l.bf16 %v35
  %v68 = vunpack.c.l.bf16 %v36
  %v69 = vunpack.c.l.bf16 %v37
  %v70 = vunpack.c.l.bf16 %v38
  %v71 = vunpack.c.l.bf16 %v39
  %v72 = vunpack.c.l.bf16 %v40
  %v73 = vunpack.c.l.bf16 %v41
  %v74 = vunpack.c.l.bf16 %v42
  %v75 = vunpack.c.l.bf16 %v43
  %v76 = vunpack.c.l.bf16 %v44
  %v77 = vunpack.c.l.bf16 %v45
  %v78 = vunpack.c.l.bf16 %v46
  %v79 = vunpack.c.l.bf16 %v47
  %v80 = vunpack.c.l.bf16 %v48
  %v81 = vunpack.c.l.bf16 %v49
  %v82 = vunpack.c.l.bf16 %v50
  %v83 = vunpack.c.l.bf16 %v51
  %v84 = vunpack.c.l.bf16 %v52
  %v85 = vunpack.c.l.bf16 %v53
  %v86 = vunpack.c.l.bf16 %v54
  %v87 = vunpack.c.l.bf16 %v55
  %v88 = vunpack.c.l.bf16 %v56
  %v89 = vunpack.c.l.bf16 %v57
  %v90 = vunpack.c.l.bf16 %v58
  %vm91 = vcmask 261120
  %v92 = vsel %vm91, %v59, 0.0
  %93 = vadd.xlane.f32.xlu0 %v92
  %v94 = vpop.xlane.xlu0 %93
  %v95 = vsel %vm91, %v60, 0.0
  %96 = vadd.xlane.f32.xlu0 %v95
  %v97 = vpop.xlane.xlu0 %96
  %v98 = vsel %vm91, %v61, 0.0
  %99 = vadd.xlane.f32.xlu0 %v98
  %v100 = vpop.xlane.xlu0 %99
  %v101 = vsel %vm91, %v62, 0.0
  %102 = vadd.xlane.f32.xlu0 %v101
  %v103 = vpop.xlane.xlu0 %102
  %v104 = vsel %vm91, %v63, 0.0
  %105 = vadd.xlane.f32.xlu0 %v104
  %v106 = vpop.xlane.xlu0 %105
  %v107 = vsel %vm91, %v64, 0.0
  %108 = vadd.xlane.f32.xlu0 %v107
  %v109 = vpop.xlane.xlu0 %108
  %v110 = vsel %vm91, %v65, 0.0
  %111 = vadd.xlane.f32.xlu0 %v110
  %v112 = vpop.xlane.xlu0 %111
  %v113 = vsel %vm91, %v66, 0.0
  %114 = vadd.xlane.f32.xlu0 %v113
  %v115 = vpop.xlane.xlu0 %114
  %v116 = vsel %vm91, %v67, 0.0
  %117 = vadd.xlane.f32.xlu0 %v116
  %v118 = vpop.xlane.xlu0 %117
  %v119 = vsel %vm91, %v68, 0.0
  %120 = vadd.xlane.f32.xlu0 %v119
  %v121 = vpop.xlane.xlu0 %120
  %v122 = vsel %vm91, %v69, 0.0
  %123 = vadd.xlane.f32.xlu0 %v122
  %v124 = vpop.xlane.xlu0 %123
  %v125 = vsel %vm91, %v70, 0.0
  %126 = vadd.xlane.f32.xlu0 %v125
  %v127 = vpop.xlane.xlu0 %126
  %v128 = vsel %vm91, %v71, 0.0
  %129 = vadd.xlane.f32.xlu0 %v128
  %v130 = vpop.xlane.xlu0 %129
  %v131 = vsel %vm91, %v72, 0.0
  %132 = vadd.xlane.f32.xlu0 %v131
  %v133 = vpop.xlane.xlu0 %132
  %v134 = vsel %vm91, %v73, 0.0
  %135 = vadd.xlane.f32.xlu0 %v134
  %v136 = vpop.xlane.xlu0 %135
  %v137 = vsel %vm91, %v74, 0.0
  %138 = vadd.xlane.f32.xlu0 %v137
  %v139 = vpop.xlane.xlu0 %138
  %v140 = vsel %vm91, %v75, 0.0
  %141 = vadd.xlane.f32.xlu0 %v140
  %v142 = vpop.xlane.xlu0 %141
  %v143 = vsel %vm91, %v76, 0.0
  %144 = vadd.xlane.f32.xlu0 %v143
  %v145 = vpop.xlane.xlu0 %144
  %v146 = vsel %vm91, %v77, 0.0
  %147 = vadd.xlane.f32.xlu0 %v146
  %v148 = vpop.xlane.xlu0 %147
  %v149 = vsel %vm91, %v78, 0.0
  %150 = vadd.xlane.f32.xlu0 %v149
  %v151 = vpop.xlane.xlu0 %150
  %v152 = vsel %vm91, %v79, 0.0
  %153 = vadd.xlane.f32.xlu0 %v152
  %v154 = vpop.xlane.xlu0 %153
  %v155 = vsel %vm91, %v80, 0.0
  %156 = vadd.xlane.f32.xlu0 %v155
  %v157 = vpop.xlane.xlu0 %156
  %v158 = vsel %vm91, %v81, 0.0
  %159 = vadd.xlane.f32.xlu0 %v158
  %v160 = vpop.xlane.xlu0 %159
  %v161 = vsel %vm91, %v82, 0.0
  %162 = vadd.xlane.f32.xlu0 %v161
  %v163 = vpop.xlane.xlu0 %162
  %v164 = vsel %vm91, %v83, 0.0
  %165 = vadd.xlane.f32.xlu0 %v164
  %v166 = vpop.xlane.xlu0 %165
  %v167 = vsel %vm91, %v84, 0.0
  %168 = vadd.xlane.f32.xlu0 %v167
  %v169 = vpop.xlane.xlu0 %168
  %v170 = vsel %vm91, %v85, 0.0
  %171 = vadd.xlane.f32.xlu0 %v170
  %v172 = vpop.xlane.xlu0 %171
  %v173 = vsel %vm91, %v86, 0.0
  %174 = vadd.xlane.f32.xlu0 %v173
  %v175 = vpop.xlane.xlu0 %174
  %v176 = vsel %vm91, %v87, 0.0
  %177 = vadd.xlane.f32.xlu0 %v176
  %v178 = vpop.xlane.xlu0 %177
  %v179 = vsel %vm91, %v88, 0.0
  %180 = vadd.xlane.f32.xlu0 %v179
  %v181 = vpop.xlane.xlu0 %180
  %v182 = vsel %vm91, %v89, 0.0
  %183 = vadd.xlane.f32.xlu0 %v182
  %v184 = vpop.xlane.xlu0 %183
  %v185 = vsel %vm91, %v90, 0.0
  %186 = vadd.xlane.f32.xlu0 %v185
  %v187 = vpop.xlane.xlu0 %186
  %v188 = vrcp.pop 32.0
  %v189 = vmul.f32 %v94, %v188
  %v190 = vmul.f32 %v97, %v188
  %v191 = vmul.f32 %v100, %v188
  %v192 = vmul.f32 %v103, %v188
  %v193 = vmul.f32 %v106, %v188
  %v194 = vmul.f32 %v109, %v188
  %v195 = vmul.f32 %v112, %v188
  %v196 = vmul.f32 %v115, %v188
  %v197 = vmul.f32 %v118, %v188
  %v198 = vmul.f32 %v121, %v188
  %v199 = vmul.f32 %v124, %v188
  %v200 = vmul.f32 %v127, %v188
  %v201 = vmul.f32 %v130, %v188
  %v202 = vmul.f32 %v133, %v188
  %v203 = vmul.f32 %v136, %v188
  %v204 = vmul.f32 %v139, %v188
  %v205 = vmul.f32 %v142, %v188
  %v206 = vmul.f32 %v145, %v188
  %v207 = vmul.f32 %v148, %v188
  %v208 = vmul.f32 %v151, %v188
  %v209 = vmul.f32 %v154, %v188
  %v210 = vmul.f32 %v157, %v188
  %v211 = vmul.f32 %v160, %v188
  %v212 = vmul.f32 %v163, %v188
  %v213 = vmul.f32 %v166, %v188
  %v214 = vmul.f32 %v169, %v188
  %v215 = vmul.f32 %v172, %v188
  %v216 = vmul.f32 %v175, %v188
  %v217 = vmul.f32 %v178, %v188
  %v218 = vmul.f32 %v181, %v188
  %v219 = vmul.f32 %v184, %v188
  %v220 = vmul.f32 %v187, %v188
  %v221 = vsub.f32 %v59, %v189
  %v222 = vsub.f32 %v60, %v190
  %v223 = vsub.f32 %v61, %v191
  %v224 = vsub.f32 %v62, %v192
  %v225 = vsub.f32 %v63, %v193
  %v226 = vsub.f32 %v64, %v194
  %v227 = vsub.f32 %v65, %v195
  %v228 = vsub.f32 %v66, %v196
  %v229 = vsub.f32 %v67, %v197
  %v230 = vsub.f32 %v68, %v198
  %v231 = vsub.f32 %v69, %v199
  %v232 = vsub.f32 %v70, %v200
  %v233 = vsub.f32 %v71, %v201
  %v234 = vsub.f32 %v72, %v202
  %v235 = vsub.f32 %v73, %v203
  %v236 = vsub.f32 %v74, %v204
  %v237 = vsub.f32 %v75, %v205
  %v238 = vsub.f32 %v76, %v206
  %v239 = vsub.f32 %v77, %v207
  %v240 = vsub.f32 %v78, %v208
  %v241 = vsub.f32 %v79, %v209
  %v242 = vsub.f32 %v80, %v210
  %v243 = vsub.f32 %v81, %v211
  %v244 = vsub.f32 %v82, %v212
  %v245 = vsub.f32 %v83, %v213
  %v246 = vsub.f32 %v84, %v214
  %v247 = vsub.f32 %v85, %v215
  %v248 = vsub.f32 %v86, %v216
  %v249 = vsub.f32 %v87, %v217
  %v250 = vsub.f32 %v88, %v218
  %v251 = vsub.f32 %v89, %v219
  %v252 = vsub.f32 %v90, %v220
  %v253 = vmul.f32 %v221, %v221
  %v254 = vmul.f32 %v222, %v222
  %v255 = vmul.f32 %v223, %v223
  %v256 = vmul.f32 %v224, %v224
  %v257 = vmul.f32 %v225, %v225
  %v258 = vmul.f32 %v226, %v226
  %v259 = vmul.f32 %v227, %v227
  %v260 = vmul.f32 %v228, %v228
  %v261 = vmul.f32 %v229, %v229
  %v262 = vmul.f32 %v230, %v230
  %v263 = vmul.f32 %v231, %v231
  %v264 = vmul.f32 %v232, %v232
  %v265 = vmul.f32 %v233, %v233
  %v266 = vmul.f32 %v234, %v234
  %v267 = vmul.f32 %v235, %v235
  %v268 = vmul.f32 %v236, %v236
  %v269 = vmul.f32 %v237, %v237
  %v270 = vmul.f32 %v238, %v238
  %v271 = vmul.f32 %v239, %v239
  %v272 = vmul.f32 %v240, %v240
  %v273 = vmul.f32 %v241, %v241
  %v274 = vmul.f32 %v242, %v242
  %v275 = vmul.f32 %v243, %v243
  %v276 = vmul.f32 %v244, %v244
  %v277 = vmul.f32 %v245, %v245
  %v278 = vmul.f32 %v246, %v246
  %v279 = vmul.f32 %v247, %v247
  %v280 = vmul.f32 %v248, %v248
  %v281 = vmul.f32 %v249, %v249
  %v282 = vmul.f32 %v250, %v250
  %v283 = vmul.f32 %v251, %v251
  %v284 = vmul.f32 %v252, %v252
  %v285 = vsel %vm91, %v253, 0.0
  %286 = vadd.xlane.f32.xlu0 %v285
  %v287 = vpop.xlane.xlu0 %286
  %v288 = vsel %vm91, %v254, 0.0
  %289 = vadd.xlane.f32.xlu0 %v288
  %v290 = vpop.xlane.xlu0 %289
  %v291 = vsel %vm91, %v255, 0.0
  %292 = vadd.xlane.f32.xlu0 %v291
  %v293 = vpop.xlane.xlu0 %292
  %v294 = vsel %vm91, %v256, 0.0
  %295 = vadd.xlane.f32.xlu0 %v294
  %v296 = vpop.xlane.xlu0 %295
  %v297 = vsel %vm91, %v257, 0.0
  %298 = vadd.xlane.f32.xlu0 %v297
  %v299 = vpop.xlane.xlu0 %298
  %v300 = vsel %vm91, %v258, 0.0
  %301 = vadd.xlane.f32.xlu0 %v300
  %v302 = vpop.xlane.xlu0 %301
  %v303 = vsel %vm91, %v259, 0.0
  %304 = vadd.xlane.f32.xlu0 %v303
  %v305 = vpop.xlane.xlu0 %304
  %v306 = vsel %vm91, %v260, 0.0
  %307 = vadd.xlane.f32.xlu0 %v306
  %v308 = vpop.xlane.xlu0 %307
  %v309 = vsel %vm91, %v261, 0.0
  %310 = vadd.xlane.f32.xlu0 %v309
  %v311 = vpop.xlane.xlu0 %310
  %v312 = vsel %vm91, %v262, 0.0
  %313 = vadd.xlane.f32.xlu0 %v312
  %v314 = vpop.xlane.xlu0 %313
  %v315 = vsel %vm91, %v263, 0.0
  %316 = vadd.xlane.f32.xlu0 %v315
  %v317 = vpop.xlane.xlu0 %316
  %v318 = vsel %vm91, %v264, 0.0
  %319 = vadd.xlane.f32.xlu0 %v318
  %v320 = vpop.xlane.xlu0 %319
  %v321 = vsel %vm91, %v265, 0.0
  %322 = vadd.xlane.f32.xlu0 %v321
  %v323 = vpop.xlane.xlu0 %322
  %v324 = vsel %vm91, %v266, 0.0
  %325 = vadd.xlane.f32.xlu0 %v324
  %v326 = vpop.xlane.xlu0 %325
  %v327 = vsel %vm91, %v267, 0.0
  %328 = vadd.xlane.f32.xlu0 %v327
  %v329 = vpop.xlane.xlu0 %328
  %v330 = vsel %vm91, %v268, 0.0
  %331 = vadd.xlane.f32.xlu0 %v330
  %v332 = vpop.xlane.xlu0 %331
  %v333 = vsel %vm91, %v269, 0.0
  %334 = vadd.xlane.f32.xlu0 %v333
  %v335 = vpop.xlane.xlu0 %334
  %v336 = vsel %vm91, %v270, 0.0
  %337 = vadd.xlane.f32.xlu0 %v336
  %v338 = vpop.xlane.xlu0 %337
  %v339 = vsel %vm91, %v271, 0.0
  %340 = vadd.xlane.f32.xlu0 %v339
  %v341 = vpop.xlane.xlu0 %340
  %v342 = vsel %vm91, %v272, 0.0
  %343 = vadd.xlane.f32.xlu0 %v342
  %v344 = vpop.xlane.xlu0 %343
  %v345 = vsel %vm91, %v273, 0.0
  %346 = vadd.xlane.f32.xlu0 %v345
  %v347 = vpop.xlane.xlu0 %346
  %v348 = vsel %vm91, %v274, 0.0
  %349 = vadd.xlane.f32.xlu0 %v348
  %v350 = vpop.xlane.xlu0 %349
  %v351 = vsel %vm91, %v275, 0.0
  %352 = vadd.xlane.f32.xlu0 %v351
  %v353 = vpop.xlane.xlu0 %352
  %v354 = vsel %vm91, %v276, 0.0
  %355 = vadd.xlane.f32.xlu0 %v354
  %v356 = vpop.xlane.xlu0 %355
  %v357 = vsel %vm91, %v277, 0.0
  %358 = vadd.xlane.f32.xlu0 %v357
  %v359 = vpop.xlane.xlu0 %358
  %v360 = vsel %vm91, %v278, 0.0
  %361 = vadd.xlane.f32.xlu0 %v360
  %v362 = vpop.xlane.xlu0 %361
  %v363 = vsel %vm91, %v279, 0.0
  %364 = vadd.xlane.f32.xlu0 %v363
  %v365 = vpop.xlane.xlu0 %364
  %v366 = vsel %vm91, %v280, 0.0
  %367 = vadd.xlane.f32.xlu0 %v366
  %v368 = vpop.xlane.xlu0 %367
  %v369 = vsel %vm91, %v281, 0.0
  %370 = vadd.xlane.f32.xlu0 %v369
  %v371 = vpop.xlane.xlu0 %370
  %v372 = vsel %vm91, %v282, 0.0
  %373 = vadd.xlane.f32.xlu0 %v372
  %v374 = vpop.xlane.xlu0 %373
  %v375 = vsel %vm91, %v283, 0.0
  %376 = vadd.xlane.f32.xlu0 %v375
  %v377 = vpop.xlane.xlu0 %376
  %v378 = vsel %vm91, %v284, 0.0
  %379 = vadd.xlane.f32.xlu0 %v378
  %v380 = vpop.xlane.xlu0 %379
  %v381 = vmul.f32 %v287, %v188
  %v382 = vmul.f32 %v290, %v188
  %v383 = vmul.f32 %v293, %v188
  %v384 = vmul.f32 %v296, %v188
  %v385 = vmul.f32 %v299, %v188
  %v386 = vmul.f32 %v302, %v188
  %v387 = vmul.f32 %v305, %v188
  %v388 = vmul.f32 %v308, %v188
  %v389 = vmul.f32 %v311, %v188
  %v390 = vmul.f32 %v314, %v188
  %v391 = vmul.f32 %v317, %v188
  %v392 = vmul.f32 %v320, %v188
  %v393 = vmul.f32 %v323, %v188
  %v394 = vmul.f32 %v326, %v188
  %v395 = vmul.f32 %v329, %v188
  %v396 = vmul.f32 %v332, %v188
  %v397 = vmul.f32 %v335, %v188
  %v398 = vmul.f32 %v338, %v188
  %v399 = vmul.f32 %v341, %v188
  %v400 = vmul.f32 %v344, %v188
  %v401 = vmul.f32 %v347, %v188
  %v402 = vmul.f32 %v350, %v188
  %v403 = vmul.f32 %v353, %v188
  %v404 = vmul.f32 %v356, %v188
  %v405 = vmul.f32 %v359, %v188
  %v406 = vmul.f32 %v362, %v188
  %v407 = vmul.f32 %v365, %v188
  %v408 = vmul.f32 %v368, %v188
  %v409 = vmul.f32 %v371, %v188
  %v410 = vmul.f32 %v374, %v188
  %v411 = vmul.f32 %v377, %v188
  %v412 = vmul.f32 %v380, %v188
  %v413 = vadd.f32 %v381, 1e-05
  %v414 = vadd.f32 %v382, 1e-05
  %v415 = vadd.f32 %v383, 1e-05
  %v416 = vadd.f32 %v384, 1e-05
  %v417 = vadd.f32 %v385, 1e-05
  %v418 = vadd.f32 %v386, 1e-05
  %v419 = vadd.f32 %v387, 1e-05
  %v420 = vadd.f32 %v388, 1e-05
  %v421 = vadd.f32 %v389, 1e-05
  %v422 = vadd.f32 %v390, 1e-05
  %v423 = vadd.f32 %v391, 1e-05
  %v424 = vadd.f32 %v392, 1e-05
  %v425 = vadd.f32 %v393, 1e-05
  %v426 = vadd.f32 %v394, 1e-05
  %v427 = vadd.f32 %v395, 1e-05
  %v428 = vadd.f32 %v396, 1e-05
  %v429 = vadd.f32 %v397, 1e-05
  %v430 = vadd.f32 %v398, 1e-05
  %v431 = vadd.f32 %v399, 1e-05
  %v432 = vadd.f32 %v400, 1e-05
  %v433 = vadd.f32 %v401, 1e-05
  %v434 = vadd.f32 %v402, 1e-05
  %v435 = vadd.f32 %v403, 1e-05
  %v436 = vadd.f32 %v404, 1e-05
  %v437 = vadd.f32 %v405, 1e-05
  %v438 = vadd.f32 %v406, 1e-05
  %v439 = vadd.f32 %v407, 1e-05
  %v440 = vadd.f32 %v408, 1e-05
  %v441 = vadd.f32 %v409, 1e-05
  %v442 = vadd.f32 %v410, 1e-05
  %v443 = vadd.f32 %v411, 1e-05
  %v444 = vadd.f32 %v412, 1e-05
  %v445 = vrsqrt.pop %v413
  %v446 = vrsqrt.pop %v414
  %v447 = vrsqrt.pop %v415
  %v448 = vrsqrt.pop %v416
  %v449 = vrsqrt.pop %v417
  %v450 = vrsqrt.pop %v418
  %v451 = vrsqrt.pop %v419
  %v452 = vrsqrt.pop %v420
  %v453 = vrsqrt.pop %v421
  %v454 = vrsqrt.pop %v422
  %v455 = vrsqrt.pop %v423
  %v456 = vrsqrt.pop %v424
  %v457 = vrsqrt.pop %v425
  %v458 = vrsqrt.pop %v426
  %v459 = vrsqrt.pop %v427
  %v460 = vrsqrt.pop %v428
  %v461 = vrsqrt.pop %v429
  %v462 = vrsqrt.pop %v430
  %v463 = vrsqrt.pop %v431
  %v464 = vrsqrt.pop %v432
  %v465 = vrsqrt.pop %v433
  %v466 = vrsqrt.pop %v434
  %v467 = vrsqrt.pop %v435
  %v468 = vrsqrt.pop %v436
  %v469 = vrsqrt.pop %v437
  %v470 = vrsqrt.pop %v438
  %v471 = vrsqrt.pop %v439
  %v472 = vrsqrt.pop %v440
  %v473 = vrsqrt.pop %v441
  %v474 = vrsqrt.pop %v442
  %v475 = vrsqrt.pop %v443
  %v476 = vrsqrt.pop %v444
  %v477 = vmul.f32 %v221, %v445
  %v478 = vmul.f32 %v222, %v446
  %v479 = vmul.f32 %v223, %v447
  %v480 = vmul.f32 %v224, %v448
  %v481 = vmul.f32 %v225, %v449
  %v482 = vmul.f32 %v226, %v450
  %v483 = vmul.f32 %v227, %v451
  %v484 = vmul.f32 %v228, %v452
  %v485 = vmul.f32 %v229, %v453
  %v486 = vmul.f32 %v230, %v454
  %v487 = vmul.f32 %v231, %v455
  %v488 = vmul.f32 %v232, %v456
  %v489 = vmul.f32 %v233, %v457
  %v490 = vmul.f32 %v234, %v458
  %v491 = vmul.f32 %v235, %v459
  %v492 = vmul.f32 %v236, %v460
  %v493 = vmul.f32 %v237, %v461
  %v494 = vmul.f32 %v238, %v462
  %v495 = vmul.f32 %v239, %v463
  %v496 = vmul.f32 %v240, %v464
  %v497 = vmul.f32 %v241, %v465
  %v498 = vmul.f32 %v242, %v466
  %v499 = vmul.f32 %v243, %v467
  %v500 = vmul.f32 %v244, %v468
  %v501 = vmul.f32 %v245, %v469
  %v502 = vmul.f32 %v246, %v470
  %v503 = vmul.f32 %v247, %v471
  %v504 = vmul.f32 %v248, %v472
  %v505 = vmul.f32 %v249, %v473
  %v506 = vmul.f32 %v250, %v474
  %v507 = vmul.f32 %v251, %v475
  %v508 = vmul.f32 %v252, %v476
  %v509 = vld [vmem:[%s1] sm:$0x1]
  %v511 = vlaneseq
  %v512 = vshrl.u32 %v511, 7
  %v513 = vsub.s32 0, %v512
  %v514 = vrot.slane %v509, %v513
  %v516 = vmul.f32 %v477, %v514
  %v517 = vmul.f32 %v478, %v514
  %v518 = vmul.f32 %v479, %v514
  %v519 = vmul.f32 %v480, %v514
  %v520 = vmul.f32 %v481, %v514
  %v521 = vmul.f32 %v482, %v514
  %v522 = vmul.f32 %v483, %v514
  %v523 = vmul.f32 %v484, %v514
  %v524 = vmul.f32 %v485, %v514
  %v525 = vmul.f32 %v486, %v514
  %v526 = vmul.f32 %v487, %v514
  %v527 = vmul.f32 %v488, %v514
  %v528 = vmul.f32 %v489, %v514
  %v529 = vmul.f32 %v490, %v514
  %v530 = vmul.f32 %v491, %v514
  %v531 = vmul.f32 %v492, %v514
  %v532 = vmul.f32 %v493, %v514
  %v533 = vmul.f32 %v494, %v514
  %v534 = vmul.f32 %v495, %v514
  %v535 = vmul.f32 %v496, %v514
  %v536 = vmul.f32 %v497, %v514
  %v537 = vmul.f32 %v498, %v514
  %v538 = vmul.f32 %v499, %v514
  %v539 = vmul.f32 %v500, %v514
  %v540 = vmul.f32 %v501, %v514
  %v541 = vmul.f32 %v502, %v514
  %v542 = vmul.f32 %v503, %v514
  %v543 = vmul.f32 %v504, %v514
  %v544 = vmul.f32 %v505, %v514
  %v545 = vmul.f32 %v506, %v514
  %v546 = vmul.f32 %v507, %v514
  %v547 = vmul.f32 %v508, %v514
  %v548 = vld [vmem:[%s2] sm:$0x1]
  %v550 = vlaneseq
  %v551 = vshrl.u32 %v550, 7
  %v552 = vsub.s32 0, %v551
  %v553 = vrot.slane %v548, %v552
  %v555 = vadd.f32 %v516, %v553
  %v556 = vadd.f32 %v517, %v553
  %v557 = vadd.f32 %v518, %v553
  %v558 = vadd.f32 %v519, %v553
  %v559 = vadd.f32 %v520, %v553
  %v560 = vadd.f32 %v521, %v553
  %v561 = vadd.f32 %v522, %v553
  %v562 = vadd.f32 %v523, %v553
  %v563 = vadd.f32 %v524, %v553
  %v564 = vadd.f32 %v525, %v553
  %v565 = vadd.f32 %v526, %v553
  %v566 = vadd.f32 %v527, %v553
  %v567 = vadd.f32 %v528, %v553
  %v568 = vadd.f32 %v529, %v553
  %v569 = vadd.f32 %v530, %v553
  %v570 = vadd.f32 %v531, %v553
  %v571 = vadd.f32 %v532, %v553
  %v572 = vadd.f32 %v533, %v553
  %v573 = vadd.f32 %v534, %v553
  %v574 = vadd.f32 %v535, %v553
  %v575 = vadd.f32 %v536, %v553
  %v576 = vadd.f32 %v537, %v553
  %v577 = vadd.f32 %v538, %v553
  %v578 = vadd.f32 %v539, %v553
  %v579 = vadd.f32 %v540, %v553
  %v580 = vadd.f32 %v541, %v553
  %v581 = vadd.f32 %v542, %v553
  %v582 = vadd.f32 %v543, %v553
  %v583 = vadd.f32 %v544, %v553
  %v584 = vadd.f32 %v545, %v553
  %v585 = vadd.f32 %v546, %v553
  %v586 = vadd.f32 %v547, %v553
  %v587 = vpack.c.bf16 %v556, %v555
  %v588 = vpack.c.bf16 %v558, %v557
  %v589 = vpack.c.bf16 %v560, %v559
  %v590 = vpack.c.bf16 %v562, %v561
  %v591 = vpack.c.bf16 %v564, %v563
  %v592 = vpack.c.bf16 %v566, %v565
  %v593 = vpack.c.bf16 %v568, %v567
  %v594 = vpack.c.bf16 %v570, %v569
  %v595 = vpack.c.bf16 %v572, %v571
  %v596 = vpack.c.bf16 %v574, %v573
  %v597 = vpack.c.bf16 %v576, %v575
  %v598 = vpack.c.bf16 %v578, %v577
  %v599 = vpack.c.bf16 %v580, %v579
  %v600 = vpack.c.bf16 %v582, %v581
  %v601 = vpack.c.bf16 %v584, %v583
  %v602 = vpack.c.bf16 %v586, %v585
  %v603 = vld [vmem:[%s3] sm:$0xf]
  %v604 = vld [vmem:[%s3 + $0x4] sm:$0xf]
  %v605 = vld [vmem:[%s3 + $0x8] sm:$0xf]
  %v606 = vld [vmem:[%s3 + $0xc] sm:$0xf]
  %v607 = vld [vmem:[%s4] sm:$0x1]
  %v609 = vlaneseq
  %v610 = vshrl.u32 %v609, 7
  %v611 = vsub.s32 0, %v610
  %v612 = vrot.slane %v607, %v611
  %v618 = vunpack.c.l.b16 %v603
  %v619 = vunpack.c.l.b16 %v604
  %v620 = vunpack.c.l.b16 %v605
  %v621 = vunpack.c.l.b16 %v606
  %v622 = vpack.c.b16 %v619, %v618
  %v623 = vpack.c.b16 %v621, %v620
  %v627 = vsel %vm91, %v587, 0
  %v630 = vsel %vm91, %v588, 0
  %v633 = vsel %vm91, %v589, 0
  %v636 = vsel %vm91, %v590, 0
  %v639 = vsel %vm91, %v591, 0
  %v642 = vsel %vm91, %v592, 0
  %v645 = vsel %vm91, %v593, 0
  %v648 = vsel %vm91, %v594, 0
  %v651 = vsel %vm91, %v595, 0
  %v654 = vsel %vm91, %v596, 0
  %v657 = vsel %vm91, %v597, 0
  %v660 = vsel %vm91, %v598, 0
  %v663 = vsel %vm91, %v599, 0
  %v666 = vsel %vm91, %v600, 0
  %v669 = vsel %vm91, %v601, 0
  %v672 = vsel %vm91, %v602, 0
  %674 = vmatprep.subr.bf16.mxu0 0
  %675 = vmatpush1.bf16.msra.mxu0 0
  %676 = vmatprep.subr.bf16.mxu0 0
  %677 = vmatpush1.bf16.msra.mxu0 0
  %678 = vmatprep.subr.bf16.mxu0 0
  %679 = vmatpush1.bf16.msra.mxu0 0
  %680 = vmatprep.subr.bf16.mxu0 0
  %681 = vmatpush1.bf16.msra.mxu0 0
  %682 = vmatprep.subr.bf16.mxu0 0
  %683 = vmatpush1.bf16.msra.mxu0 0
  %684 = vmatprep.subr.bf16.mxu0 0
  %685 = vmatpush1.bf16.msra.mxu0 0
  %686 = vmatprep.subr.bf16.mxu0 0
  %687 = vmatpush1.bf16.msra.mxu0 %v623
  %688 = vmatprep.subr.bf16.mxu0 0
  %689 = vmatpush1.bf16.msra.mxu0 %v622
  %690 = vmatprep.subr.bf16.mxu0 0
  %691 = vmatpush2.bf16.msra.mxu0 0
  %692 = vmatprep.subr.bf16.mxu0 0
  %693 = vmatpush2.bf16.msra.mxu0 0
  %694 = vmatprep.subr.bf16.mxu0 0
  %695 = vmatpush2.bf16.msra.mxu0 0
  %696 = vmatprep.subr.bf16.mxu0 0
  %697 = vmatpush2.bf16.msra.mxu0 0
  %698 = vmatprep.subr.bf16.mxu0 0
  %699 = vmatpush2.bf16.msra.mxu0 0
  %700 = vmatprep.subr.bf16.mxu0 0
  %701 = vmatpush2.bf16.msra.mxu0 0
  %702 = vmatprep.subr.bf16.mxu0 0
  %703 = vmatpush2.bf16.msra.mxu0 0
  %704 = vmatprep.subr.bf16.mxu0 0
  %705 = vmatpush2.bf16.msra.mxu0 0
  %706 = vmatprep.mubr.bf16.mxu0 0
  %707 = vmatmul.mubr.bf16.gmra.mxu0 %v627
  %v708 = vpop.f32.mrf.mxu0
  %v709 = vadd.f32 %v612, %v708
  %v710 = vpop.f32.mrf.mxu0
  %v711 = vpop.f32.mrf.mxu0
  %v712 = vadd.f32 %v612, %v711
  %v713 = vpop.f32.mrf.mxu0
  %714 = vmatprep.mubr.bf16.mxu0 0
  %715 = vmatmul.mubr.bf16.gmra.mxu0 %v630
  %v716 = vpop.f32.mrf.mxu0
  %v717 = vadd.f32 %v612, %v716
  %v718 = vpop.f32.mrf.mxu0
  %v719 = vpop.f32.mrf.mxu0
  %v720 = vadd.f32 %v612, %v719
  %v721 = vpop.f32.mrf.mxu0
  %722 = vmatprep.mubr.bf16.mxu0 0
  %723 = vmatmul.mubr.bf16.gmra.mxu0 %v633
  %v724 = vpop.f32.mrf.mxu0
  %v725 = vadd.f32 %v612, %v724
  %v726 = vpop.f32.mrf.mxu0
  %v727 = vpop.f32.mrf.mxu0
  %v728 = vadd.f32 %v612, %v727
  %v729 = vpop.f32.mrf.mxu0
  %730 = vmatprep.mubr.bf16.mxu0 0
  %731 = vmatmul.mubr.bf16.gmra.mxu0 %v636
  %v732 = vpop.f32.mrf.mxu0
  %v733 = vadd.f32 %v612, %v732
  %v734 = vpop.f32.mrf.mxu0
  %v735 = vpop.f32.mrf.mxu0
  %v736 = vadd.f32 %v612, %v735
  %v737 = vpop.f32.mrf.mxu0
  %738 = vmatprep.mubr.bf16.mxu0 0
  %739 = vmatmul.mubr.bf16.gmra.mxu0 %v639
  %v740 = vpop.f32.mrf.mxu0
  %v741 = vadd.f32 %v612, %v740
  %v742 = vpop.f32.mrf.mxu0
  %v743 = vpop.f32.mrf.mxu0
  %v744 = vadd.f32 %v612, %v743
  %v745 = vpop.f32.mrf.mxu0
  %746 = vmatprep.mubr.bf16.mxu0 0
  %747 = vmatmul.mubr.bf16.gmra.mxu0 %v642
  %v748 = vpop.f32.mrf.mxu0
  %v749 = vadd.f32 %v612, %v748
  %v750 = vpop.f32.mrf.mxu0
  %v751 = vpop.f32.mrf.mxu0
  %v752 = vadd.f32 %v612, %v751
  %v753 = vpop.f32.mrf.mxu0
  %754 = vmatprep.mubr.bf16.mxu0 0
  %755 = vmatmul.mubr.bf16.gmra.mxu0 %v645
  %v756 = vpop.f32.mrf.mxu0
  %v757 = vadd.f32 %v612, %v756
  %v758 = vpop.f32.mrf.mxu0
  %v759 = vpop.f32.mrf.mxu0
  %v760 = vadd.f32 %v612, %v759
  %v761 = vpop.f32.mrf.mxu0
  %762 = vmatprep.mubr.bf16.mxu0 0
  %763 = vmatmul.mubr.bf16.gmra.mxu0 %v648
  %v764 = vpop.f32.mrf.mxu0
  %v765 = vadd.f32 %v612, %v764
  %v766 = vpop.f32.mrf.mxu0
  %v767 = vpop.f32.mrf.mxu0
  %v768 = vadd.f32 %v612, %v767
  %v769 = vpop.f32.mrf.mxu0
  %770 = vmatprep.mubr.bf16.mxu0 0
  %771 = vmatmul.mubr.bf16.gmra.mxu0 %v651
  %v772 = vpop.f32.mrf.mxu0
  %v773 = vadd.f32 %v612, %v772
  %v774 = vpop.f32.mrf.mxu0
  %v775 = vpop.f32.mrf.mxu0
  %v776 = vadd.f32 %v612, %v775
  %v777 = vpop.f32.mrf.mxu0
  %778 = vmatprep.mubr.bf16.mxu0 0
  %779 = vmatmul.mubr.bf16.gmra.mxu0 %v654
  %v780 = vpop.f32.mrf.mxu0
  %v781 = vadd.f32 %v612, %v780
  %v782 = vpop.f32.mrf.mxu0
  %v783 = vpop.f32.mrf.mxu0
  %v784 = vadd.f32 %v612, %v783
  %v785 = vpop.f32.mrf.mxu0
  %786 = vmatprep.mubr.bf16.mxu0 0
  %787 = vmatmul.mubr.bf16.gmra.mxu0 %v657
  %v788 = vpop.f32.mrf.mxu0
  %v789 = vadd.f32 %v612, %v788
  %v790 = vpop.f32.mrf.mxu0
  %v791 = vpop.f32.mrf.mxu0
  %v792 = vadd.f32 %v612, %v791
  %v793 = vpop.f32.mrf.mxu0
  %794 = vmatprep.mubr.bf16.mxu0 0
  %795 = vmatmul.mubr.bf16.gmra.mxu0 %v660
  %v796 = vpop.f32.mrf.mxu0
  %v797 = vadd.f32 %v612, %v796
  %v798 = vpop.f32.mrf.mxu0
  %v799 = vpop.f32.mrf.mxu0
  %v800 = vadd.f32 %v612, %v799
  %v801 = vpop.f32.mrf.mxu0
  %802 = vmatprep.mubr.bf16.mxu0 0
  %803 = vmatmul.mubr.bf16.gmra.mxu0 %v663
  %v804 = vpop.f32.mrf.mxu0
  %v805 = vadd.f32 %v612, %v804
  %v806 = vpop.f32.mrf.mxu0
  %v807 = vpop.f32.mrf.mxu0
  %v808 = vadd.f32 %v612, %v807
  %v809 = vpop.f32.mrf.mxu0
  %810 = vmatprep.mubr.bf16.mxu0 0
  %811 = vmatmul.mubr.bf16.gmra.mxu0 %v666
  %v812 = vpop.f32.mrf.mxu0
  %v813 = vadd.f32 %v612, %v812
  %v814 = vpop.f32.mrf.mxu0
  %v815 = vpop.f32.mrf.mxu0
  %v816 = vadd.f32 %v612, %v815
  %v817 = vpop.f32.mrf.mxu0
  %818 = vmatprep.mubr.bf16.mxu0 0
  %819 = vmatmul.mubr.bf16.gmra.mxu0 %v669
  %v820 = vpop.f32.mrf.mxu0
  %v821 = vadd.f32 %v612, %v820
  %v822 = vpop.f32.mrf.mxu0
  %v823 = vpop.f32.mrf.mxu0
  %v824 = vadd.f32 %v612, %v823
  %v825 = vpop.f32.mrf.mxu0
  %826 = vmatprep.mubr.bf16.mxu0 0
  %827 = vmatmul.mubr.bf16.gmra.mxu0 %v672
  %v828 = vpop.f32.mrf.mxu0
  %v829 = vadd.f32 %v612, %v828
  %v830 = vpop.f32.mrf.mxu0
  %v831 = vpop.f32.mrf.mxu0
  %v832 = vadd.f32 %v612, %v831
  %v833 = vpop.f32.mrf.mxu0
  %834 = vdwg.mxu0
  %v835 = vmul.f32 %v709, 0.5
  %v836 = vmul.f32 %v712, 0.5
  %v837 = vmul.f32 %v717, 0.5
  %v838 = vmul.f32 %v720, 0.5
  %v839 = vmul.f32 %v725, 0.5
  %v840 = vmul.f32 %v728, 0.5
  %v841 = vmul.f32 %v733, 0.5
  %v842 = vmul.f32 %v736, 0.5
  %v843 = vmul.f32 %v741, 0.5
  %v844 = vmul.f32 %v744, 0.5
  %v845 = vmul.f32 %v749, 0.5
  %v846 = vmul.f32 %v752, 0.5
  %v847 = vmul.f32 %v757, 0.5
  %v848 = vmul.f32 %v760, 0.5
  %v849 = vmul.f32 %v765, 0.5
  %v850 = vmul.f32 %v768, 0.5
  %v851 = vmul.f32 %v773, 0.5
  %v852 = vmul.f32 %v776, 0.5
  %v853 = vmul.f32 %v781, 0.5
  %v854 = vmul.f32 %v784, 0.5
  %v855 = vmul.f32 %v789, 0.5
  %v856 = vmul.f32 %v792, 0.5
  %v857 = vmul.f32 %v797, 0.5
  %v858 = vmul.f32 %v800, 0.5
  %v859 = vmul.f32 %v805, 0.5
  %v860 = vmul.f32 %v808, 0.5
  %v861 = vmul.f32 %v813, 0.5
  %v862 = vmul.f32 %v816, 0.5
  %v863 = vmul.f32 %v821, 0.5
  %v864 = vmul.f32 %v824, 0.5
  %v865 = vmul.f32 %v829, 0.5
  %v866 = vmul.f32 %v832, 0.5
  %v867 = vmul.f32 %v709, 0.70710677
  %v868 = vmul.f32 %v712, 0.70710677
  %v869 = vmul.f32 %v717, 0.70710677
  %v870 = vmul.f32 %v720, 0.70710677
  %v871 = vmul.f32 %v725, 0.70710677
  %v872 = vmul.f32 %v728, 0.70710677
  %v873 = vmul.f32 %v733, 0.70710677
  %v874 = vmul.f32 %v736, 0.70710677
  %v875 = vmul.f32 %v741, 0.70710677
  %v876 = vmul.f32 %v744, 0.70710677
  %v877 = vmul.f32 %v749, 0.70710677
  %v878 = vmul.f32 %v752, 0.70710677
  %v879 = vmul.f32 %v757, 0.70710677
  %v880 = vmul.f32 %v760, 0.70710677
  %v881 = vmul.f32 %v765, 0.70710677
  %v882 = vmul.f32 %v768, 0.70710677
  %v883 = vmul.f32 %v773, 0.70710677
  %v884 = vmul.f32 %v776, 0.70710677
  %v885 = vmul.f32 %v781, 0.70710677
  %v886 = vmul.f32 %v784, 0.70710677
  %v887 = vmul.f32 %v789, 0.70710677
  %v888 = vmul.f32 %v792, 0.70710677
  %v889 = vmul.f32 %v797, 0.70710677
  %v890 = vmul.f32 %v800, 0.70710677
  %v891 = vmul.f32 %v805, 0.70710677
  %v892 = vmul.f32 %v808, 0.70710677
  %v893 = vmul.f32 %v813, 0.70710677
  %v894 = vmul.f32 %v816, 0.70710677
  %v895 = vmul.f32 %v821, 0.70710677
  %v896 = vmul.f32 %v824, 0.70710677
  %v897 = vmul.f32 %v829, 0.70710677
  %v898 = vmul.f32 %v832, 0.70710677
  %v899 = verf.f32.pop %v867
  %v900 = verf.f32.pop %v868
  %v901 = verf.f32.pop %v869
  %v902 = verf.f32.pop %v870
  %v903 = verf.f32.pop %v871
  %v904 = verf.f32.pop %v872
  %v905 = verf.f32.pop %v873
  %v906 = verf.f32.pop %v874
  %v907 = verf.f32.pop %v875
  %v908 = verf.f32.pop %v876
  %v909 = verf.f32.pop %v877
  %v910 = verf.f32.pop %v878
  %v911 = verf.f32.pop %v879
  %v912 = verf.f32.pop %v880
  %v913 = verf.f32.pop %v881
  %v914 = verf.f32.pop %v882
  %v915 = verf.f32.pop %v883
  %v916 = verf.f32.pop %v884
  %v917 = verf.f32.pop %v885
  %v918 = verf.f32.pop %v886
  %v919 = verf.f32.pop %v887
  %v920 = verf.f32.pop %v888
  %v921 = verf.f32.pop %v889
  %v922 = verf.f32.pop %v890
  %v923 = verf.f32.pop %v891
  %v924 = verf.f32.pop %v892
  %v925 = verf.f32.pop %v893
  %v926 = verf.f32.pop %v894
  %v927 = verf.f32.pop %v895
  %v928 = verf.f32.pop %v896
  %v929 = verf.f32.pop %v897
  %v930 = verf.f32.pop %v898
  %v931 = vadd.f32 %v899, 1.0
  %v932 = vadd.f32 %v900, 1.0
  %v933 = vadd.f32 %v901, 1.0
  %v934 = vadd.f32 %v902, 1.0
  %v935 = vadd.f32 %v903, 1.0
  %v936 = vadd.f32 %v904, 1.0
  %v937 = vadd.f32 %v905, 1.0
  %v938 = vadd.f32 %v906, 1.0
  %v939 = vadd.f32 %v907, 1.0
  %v940 = vadd.f32 %v908, 1.0
  %v941 = vadd.f32 %v909, 1.0
  %v942 = vadd.f32 %v910, 1.0
  %v943 = vadd.f32 %v911, 1.0
  %v944 = vadd.f32 %v912, 1.0
  %v945 = vadd.f32 %v913, 1.0
  %v946 = vadd.f32 %v914, 1.0
  %v947 = vadd.f32 %v915, 1.0
  %v948 = vadd.f32 %v916, 1.0
  %v949 = vadd.f32 %v917, 1.0
  %v950 = vadd.f32 %v918, 1.0
  %v951 = vadd.f32 %v919, 1.0
  %v952 = vadd.f32 %v920, 1.0
  %v953 = vadd.f32 %v921, 1.0
  %v954 = vadd.f32 %v922, 1.0
  %v955 = vadd.f32 %v923, 1.0
  %v956 = vadd.f32 %v924, 1.0
  %v957 = vadd.f32 %v925, 1.0
  %v958 = vadd.f32 %v926, 1.0
  %v959 = vadd.f32 %v927, 1.0
  %v960 = vadd.f32 %v928, 1.0
  %v961 = vadd.f32 %v929, 1.0
  %v962 = vadd.f32 %v930, 1.0
  %v963 = vmul.f32 %v835, %v931
  %v964 = vmul.f32 %v836, %v932
  %v965 = vmul.f32 %v837, %v933
  %v966 = vmul.f32 %v838, %v934
  %v967 = vmul.f32 %v839, %v935
  %v968 = vmul.f32 %v840, %v936
  %v969 = vmul.f32 %v841, %v937
  %v970 = vmul.f32 %v842, %v938
  %v971 = vmul.f32 %v843, %v939
  %v972 = vmul.f32 %v844, %v940
  %v973 = vmul.f32 %v845, %v941
  %v974 = vmul.f32 %v846, %v942
  %v975 = vmul.f32 %v847, %v943
  %v976 = vmul.f32 %v848, %v944
  %v977 = vmul.f32 %v849, %v945
  %v978 = vmul.f32 %v850, %v946
  %v979 = vmul.f32 %v851, %v947
  %v980 = vmul.f32 %v852, %v948
  %v981 = vmul.f32 %v853, %v949
  %v982 = vmul.f32 %v854, %v950
  %v983 = vmul.f32 %v855, %v951
  %v984 = vmul.f32 %v856, %v952
  %v985 = vmul.f32 %v857, %v953
  %v986 = vmul.f32 %v858, %v954
  %v987 = vmul.f32 %v859, %v955
  %v988 = vmul.f32 %v860, %v956
  %v989 = vmul.f32 %v861, %v957
  %v990 = vmul.f32 %v862, %v958
  %v991 = vmul.f32 %v863, %v959
  %v992 = vmul.f32 %v864, %v960
  %v993 = vmul.f32 %v865, %v961
  %v994 = vmul.f32 %v866, %v962
  %v995 = vpack.c.bf16 %v964, %v963
  %v996 = vpack.c.bf16 %v966, %v965
  %v997 = vpack.c.bf16 %v968, %v967
  %v998 = vpack.c.bf16 %v970, %v969
  %v999 = vpack.c.bf16 %v972, %v971
  %v1000 = vpack.c.bf16 %v974, %v973
  %v1001 = vpack.c.bf16 %v976, %v975
  %v1002 = vpack.c.bf16 %v978, %v977
  %v1003 = vpack.c.bf16 %v980, %v979
  %v1004 = vpack.c.bf16 %v982, %v981
  %v1005 = vpack.c.bf16 %v984, %v983
  %v1006 = vpack.c.bf16 %v986, %v985
  %v1007 = vpack.c.bf16 %v988, %v987
  %v1008 = vpack.c.bf16 %v990, %v989
  %v1009 = vpack.c.bf16 %v992, %v991
  %v1010 = vpack.c.bf16 %v994, %v993
  %v1011 = vld [vmem:[%s5] sm:$0xf]
  %v1012 = vld [vmem:[%s5 + $0x4] sm:$0xf]
  %v1013 = vld [vmem:[%s5 + $0x8] sm:$0xf]
  %v1014 = vld [vmem:[%s5 + $0xc] sm:$0xf]
  %v1015 = vld [vmem:[%s5 + $0x10] sm:$0xf]
  %v1016 = vld [vmem:[%s5 + $0x14] sm:$0xf]
  %v1017 = vld [vmem:[%s5 + $0x18] sm:$0xf]
  %v1018 = vld [vmem:[%s5 + $0x1c] sm:$0xf]
  %v1019 = vld [vmem:[%s6] sm:$0x1]
  %v1021 = vlaneseq
  %v1022 = vshrl.u32 %v1021, 7
  %v1023 = vsub.s32 0, %v1022
  %v1024 = vrot.slane %v1019, %v1023
  %v1034 = vunpack.c.l.b16 %v1011
  %v1035 = vunpack.c.l.b16 %v1012
  %v1036 = vunpack.c.l.b16 %v1013
  %v1037 = vunpack.c.l.b16 %v1014
  %v1038 = vunpack.c.l.b16 %v1015
  %v1039 = vunpack.c.l.b16 %v1016
  %v1040 = vunpack.c.l.b16 %v1017
  %v1041 = vunpack.c.l.b16 %v1018
  %v1042 = vpack.c.b16 %v1035, %v1034
  %v1043 = vpack.c.b16 %v1037, %v1036
  %v1044 = vpack.c.b16 %v1039, %v1038
  %v1045 = vpack.c.b16 %v1041, %v1040
  %vm1050 = vcmask 523264
  %v1052 = vsel %vm1050, %v995, 0
  %v1055 = vsel %vm1050, %v996, 0
  %v1058 = vsel %vm1050, %v997, 0
  %v1061 = vsel %vm1050, %v998, 0
  %v1064 = vsel %vm1050, %v999, 0
  %v1067 = vsel %vm1050, %v1000, 0
  %v1070 = vsel %vm1050, %v1001, 0
  %v1073 = vsel %vm1050, %v1002, 0
  %v1076 = vsel %vm1050, %v1003, 0
  %v1079 = vsel %vm1050, %v1004, 0
  %v1082 = vsel %vm1050, %v1005, 0
  %v1085 = vsel %vm1050, %v1006, 0
  %v1088 = vsel %vm1050, %v1007, 0
  %v1091 = vsel %vm1050, %v1008, 0
  %v1094 = vsel %vm1050, %v1009, 0
  %v1097 = vsel %vm1050, %v1010, 0
  %1099 = vmatprep.subr.bf16.mxu0 0
  %1100 = vmatpush1.bf16.msra.mxu0 0
  %1101 = vmatprep.subr.bf16.mxu0 0
  %1102 = vmatpush1.bf16.msra.mxu0 0
  %1103 = vmatprep.subr.bf16.mxu0 0
  %1104 = vmatpush1.bf16.msra.mxu0 0
  %1105 = vmatprep.subr.bf16.mxu0 0
  %1106 = vmatpush1.bf16.msra.mxu0 0
  %1107 = vmatprep.subr.bf16.mxu0 0
  %1108 = vmatpush1.bf16.msra.mxu0 %v1045
  %1109 = vmatprep.subr.bf16.mxu0 0
  %1110 = vmatpush1.bf16.msra.mxu0 %v1044
  %1111 = vmatprep.subr.bf16.mxu0 0
  %1112 = vmatpush1.bf16.msra.mxu0 %v1043
  %1113 = vmatprep.subr.bf16.mxu0 0
  %1114 = vmatpush1.bf16.msra.mxu0 %v1042
  %1115 = vmatprep.subr.bf16.mxu0 0
  %1116 = vmatpush2.bf16.msra.mxu0 0
  %1117 = vmatprep.subr.bf16.mxu0 0
  %1118 = vmatpush2.bf16.msra.mxu0 0
  %1119 = vmatprep.subr.bf16.mxu0 0
  %1120 = vmatpush2.bf16.msra.mxu0 0
  %1121 = vmatprep.subr.bf16.mxu0 0
  %1122 = vmatpush2.bf16.msra.mxu0 0
  %1123 = vmatprep.subr.bf16.mxu0 0
  %1124 = vmatpush2.bf16.msra.mxu0 0
  %1125 = vmatprep.subr.bf16.mxu0 0
  %1126 = vmatpush2.bf16.msra.mxu0 0
  %1127 = vmatprep.subr.bf16.mxu0 0
  %1128 = vmatpush2.bf16.msra.mxu0 0
  %1129 = vmatprep.subr.bf16.mxu0 0
  %1130 = vmatpush2.bf16.msra.mxu0 0
  %1131 = vmatprep.mubr.bf16.mxu0 0
  %1132 = vmatmul.mubr.bf16.gmra.mxu0 %v1052
  %v1133 = vpop.f32.mrf.mxu0
  %v1134 = vadd.f32 %v1024, %v1133
  %v1135 = vpop.f32.mrf.mxu0
  %v1136 = vpop.f32.mrf.mxu0
  %v1137 = vadd.f32 %v1024, %v1136
  %v1138 = vpop.f32.mrf.mxu0
  %1139 = vmatprep.mubr.bf16.mxu0 0
  %1140 = vmatmul.mubr.bf16.gmra.mxu0 %v1055
  %v1141 = vpop.f32.mrf.mxu0
  %v1142 = vadd.f32 %v1024, %v1141
  %v1143 = vpop.f32.mrf.mxu0
  %v1144 = vpop.f32.mrf.mxu0
  %v1145 = vadd.f32 %v1024, %v1144
  %v1146 = vpop.f32.mrf.mxu0
  %1147 = vmatprep.mubr.bf16.mxu0 0
  %1148 = vmatmul.mubr.bf16.gmra.mxu0 %v1058
  %v1149 = vpop.f32.mrf.mxu0
  %v1150 = vadd.f32 %v1024, %v1149
  %v1151 = vpop.f32.mrf.mxu0
  %v1152 = vpop.f32.mrf.mxu0
  %v1153 = vadd.f32 %v1024, %v1152
  %v1154 = vpop.f32.mrf.mxu0
  %1155 = vmatprep.mubr.bf16.mxu0 0
  %1156 = vmatmul.mubr.bf16.gmra.mxu0 %v1061
  %v1157 = vpop.f32.mrf.mxu0
  %v1158 = vadd.f32 %v1024, %v1157
  %v1159 = vpop.f32.mrf.mxu0
  %v1160 = vpop.f32.mrf.mxu0
  %v1161 = vadd.f32 %v1024, %v1160
  %v1162 = vpop.f32.mrf.mxu0
  %1163 = vmatprep.mubr.bf16.mxu0 0
  %1164 = vmatmul.mubr.bf16.gmra.mxu0 %v1064
  %v1165 = vpop.f32.mrf.mxu0
  %v1166 = vadd.f32 %v1024, %v1165
  %v1167 = vpop.f32.mrf.mxu0
  %v1168 = vpop.f32.mrf.mxu0
  %v1169 = vadd.f32 %v1024, %v1168
  %v1170 = vpop.f32.mrf.mxu0
  %1171 = vmatprep.mubr.bf16.mxu0 0
  %1172 = vmatmul.mubr.bf16.gmra.mxu0 %v1067
  %v1173 = vpop.f32.mrf.mxu0
  %v1174 = vadd.f32 %v1024, %v1173
  %v1175 = vpop.f32.mrf.mxu0
  %v1176 = vpop.f32.mrf.mxu0
  %v1177 = vadd.f32 %v1024, %v1176
  %v1178 = vpop.f32.mrf.mxu0
  %1179 = vmatprep.mubr.bf16.mxu0 0
  %1180 = vmatmul.mubr.bf16.gmra.mxu0 %v1070
  %v1181 = vpop.f32.mrf.mxu0
  %v1182 = vadd.f32 %v1024, %v1181
  %v1183 = vpop.f32.mrf.mxu0
  %v1184 = vpop.f32.mrf.mxu0
  %v1185 = vadd.f32 %v1024, %v1184
  %v1186 = vpop.f32.mrf.mxu0
  %1187 = vmatprep.mubr.bf16.mxu0 0
  %1188 = vmatmul.mubr.bf16.gmra.mxu0 %v1073
  %v1189 = vpop.f32.mrf.mxu0
  %v1190 = vadd.f32 %v1024, %v1189
  %v1191 = vpop.f32.mrf.mxu0
  %v1192 = vpop.f32.mrf.mxu0
  %v1193 = vadd.f32 %v1024, %v1192
  %v1194 = vpop.f32.mrf.mxu0
  %1195 = vmatprep.mubr.bf16.mxu0 0
  %1196 = vmatmul.mubr.bf16.gmra.mxu0 %v1076
  %v1197 = vpop.f32.mrf.mxu0
  %v1198 = vadd.f32 %v1024, %v1197
  %v1199 = vpop.f32.mrf.mxu0
  %v1200 = vpop.f32.mrf.mxu0
  %v1201 = vadd.f32 %v1024, %v1200
  %v1202 = vpop.f32.mrf.mxu0
  %1203 = vmatprep.mubr.bf16.mxu0 0
  %1204 = vmatmul.mubr.bf16.gmra.mxu0 %v1079
  %v1205 = vpop.f32.mrf.mxu0
  %v1206 = vadd.f32 %v1024, %v1205
  %v1207 = vpop.f32.mrf.mxu0
  %v1208 = vpop.f32.mrf.mxu0
  %v1209 = vadd.f32 %v1024, %v1208
  %v1210 = vpop.f32.mrf.mxu0
  %1211 = vmatprep.mubr.bf16.mxu0 0
  %1212 = vmatmul.mubr.bf16.gmra.mxu0 %v1082
  %v1213 = vpop.f32.mrf.mxu0
  %v1214 = vadd.f32 %v1024, %v1213
  %v1215 = vpop.f32.mrf.mxu0
  %v1216 = vpop.f32.mrf.mxu0
  %v1217 = vadd.f32 %v1024, %v1216
  %v1218 = vpop.f32.mrf.mxu0
  %1219 = vmatprep.mubr.bf16.mxu0 0
  %1220 = vmatmul.mubr.bf16.gmra.mxu0 %v1085
  %v1221 = vpop.f32.mrf.mxu0
  %v1222 = vadd.f32 %v1024, %v1221
  %v1223 = vpop.f32.mrf.mxu0
  %v1224 = vpop.f32.mrf.mxu0
  %v1225 = vadd.f32 %v1024, %v1224
  %v1226 = vpop.f32.mrf.mxu0
  %1227 = vmatprep.mubr.bf16.mxu0 0
  %1228 = vmatmul.mubr.bf16.gmra.mxu0 %v1088
  %v1229 = vpop.f32.mrf.mxu0
  %v1230 = vadd.f32 %v1024, %v1229
  %v1231 = vpop.f32.mrf.mxu0
  %v1232 = vpop.f32.mrf.mxu0
  %v1233 = vadd.f32 %v1024, %v1232
  %v1234 = vpop.f32.mrf.mxu0
  %1235 = vmatprep.mubr.bf16.mxu0 0
  %1236 = vmatmul.mubr.bf16.gmra.mxu0 %v1091
  %v1237 = vpop.f32.mrf.mxu0
  %v1238 = vadd.f32 %v1024, %v1237
  %v1239 = vpop.f32.mrf.mxu0
  %v1240 = vpop.f32.mrf.mxu0
  %v1241 = vadd.f32 %v1024, %v1240
  %v1242 = vpop.f32.mrf.mxu0
  %1243 = vmatprep.mubr.bf16.mxu0 0
  %1244 = vmatmul.mubr.bf16.gmra.mxu0 %v1094
  %v1245 = vpop.f32.mrf.mxu0
  %v1246 = vadd.f32 %v1024, %v1245
  %v1247 = vpop.f32.mrf.mxu0
  %v1248 = vpop.f32.mrf.mxu0
  %v1249 = vadd.f32 %v1024, %v1248
  %v1250 = vpop.f32.mrf.mxu0
  %1251 = vmatprep.mubr.bf16.mxu0 0
  %1252 = vmatmul.mubr.bf16.gmra.mxu0 %v1097
  %v1253 = vpop.f32.mrf.mxu0
  %v1254 = vadd.f32 %v1024, %v1253
  %v1255 = vpop.f32.mrf.mxu0
  %v1256 = vpop.f32.mrf.mxu0
  %v1257 = vadd.f32 %v1024, %v1256
  %v1258 = vpop.f32.mrf.mxu0
  %1259 = vdwg.mxu0
  %1260 = vst.msk [vmem:[%s7] sm:$0xff] %vm91, %v1134
  %1261 = vst.msk [vmem:[%s7 + $0x8] sm:$0xff] %vm91, %v1137
  %1262 = vst.msk [vmem:[%s7 + $0x10] sm:$0xff] %vm91, %v1142
  %1263 = vst.msk [vmem:[%s7 + $0x18] sm:$0xff] %vm91, %v1145
  %1264 = vst.msk [vmem:[%s7 + $0x20] sm:$0xff] %vm91, %v1150
  %1265 = vst.msk [vmem:[%s7 + $0x28] sm:$0xff] %vm91, %v1153
  %1266 = vst.msk [vmem:[%s7 + $0x30] sm:$0xff] %vm91, %v1158
  %1267 = vst.msk [vmem:[%s7 + $0x38] sm:$0xff] %vm91, %v1161
  %1268 = vst.msk [vmem:[%s7 + $0x40] sm:$0xff] %vm91, %v1166
  %1269 = vst.msk [vmem:[%s7 + $0x48] sm:$0xff] %vm91, %v1169
  %1270 = vst.msk [vmem:[%s7 + $0x50] sm:$0xff] %vm91, %v1174
  %1271 = vst.msk [vmem:[%s7 + $0x58] sm:$0xff] %vm91, %v1177
  %1272 = vst.msk [vmem:[%s7 + $0x60] sm:$0xff] %vm91, %v1182
  %1273 = vst.msk [vmem:[%s7 + $0x68] sm:$0xff] %vm91, %v1185
  %1274 = vst.msk [vmem:[%s7 + $0x70] sm:$0xff] %vm91, %v1190
  %1275 = vst.msk [vmem:[%s7 + $0x78] sm:$0xff] %vm91, %v1193
  %1276 = vst.msk [vmem:[%s7 + $0x80] sm:$0xff] %vm91, %v1198
  %1277 = vst.msk [vmem:[%s7 + $0x88] sm:$0xff] %vm91, %v1201
  %1278 = vst.msk [vmem:[%s7 + $0x90] sm:$0xff] %vm91, %v1206
  %1279 = vst.msk [vmem:[%s7 + $0x98] sm:$0xff] %vm91, %v1209
  %1280 = vst.msk [vmem:[%s7 + $0xa0] sm:$0xff] %vm91, %v1214
  %1281 = vst.msk [vmem:[%s7 + $0xa8] sm:$0xff] %vm91, %v1217
  %1282 = vst.msk [vmem:[%s7 + $0xb0] sm:$0xff] %vm91, %v1222
  %1283 = vst.msk [vmem:[%s7 + $0xb8] sm:$0xff] %vm91, %v1225
  %1284 = vst.msk [vmem:[%s7 + $0xc0] sm:$0xff] %vm91, %v1230
  %1285 = vst.msk [vmem:[%s7 + $0xc8] sm:$0xff] %vm91, %v1233
  %1286 = vst.msk [vmem:[%s7 + $0xd0] sm:$0xff] %vm91, %v1238
  %1287 = vst.msk [vmem:[%s7 + $0xd8] sm:$0xff] %vm91, %v1241
  %1288 = vst.msk [vmem:[%s7 + $0xe0] sm:$0xff] %vm91, %v1246
  %1289 = vst.msk [vmem:[%s7 + $0xe8] sm:$0xff] %vm91, %v1249
  %1290 = vst.msk [vmem:[%s7 + $0xf0] sm:$0xff] %vm91, %v1254
  %1291 = vst.msk [vmem:[%s7 + $0xf8] sm:$0xff] %vm91, %v1257
  // Predicated region
  $region30: #{tpu_custom_call.1} parent=0 // pred_check
    _
  $region31: #{tpu_custom_call.1} parent=0 // pred_check_branch
    %1293 = sbr.rel (0) target = $region33
  $region32: #{tpu_custom_call.1} parent=0 // pred_region
    _
  $region33: #{tpu_custom_call.1} parent=0 // pred_fallthru
    _
  // Predicated region
  $region34: #{tpu_custom_call.1} parent=0 // pred_check
    _
  $region35: #{tpu_custom_call.1} parent=0 // pred_check_branch
    %1295 = sbr.rel (0) target = $region37
  $region36: #{tpu_custom_call.1} parent=0 // pred_region
    _
  $region37: #{tpu_custom_call.1} parent=0 // pred_fallthru
    _

</llo_original>
